<compile_context>
chip_gen: v7x
topology: tpu7x:2x2x1
jax: 0.10.0
libtpu: 0.0.40
codegen_flags: <defaults>
</compile_context>

<pallas_src>
import math

import jax
import jax.numpy as jnp
from jax.experimental import pallas as pl
from jax.experimental.pallas import tpu as pltpu

# Small, deterministic hyperparameters consistent with the module structure
# (reference uses d_model=512, d_ff=2048, n_heads=8, d_k=d_v=64; scaled down).
D_MODEL = 32
D_FF = 64
N_HEADS = 4
D_K = 8          # = d_v
LN_EPS = 1e-5    # torch.nn.LayerNorm default


def _layernorm(x, g, b):
    mu = jnp.mean(x, axis=-1, keepdims=True)
    var = jnp.mean((x - mu) ** 2, axis=-1, keepdims=True)   # biased, like PyTorch
    return (x - mu) * jax.lax.rsqrt(var + LN_EPS) * g + b


def encoder_layer_kernel(mask_ref, x_ref,
                         wqkv_ref, bqkv_ref,
                         wo_ref, bo_ref, ln1g_ref, ln1b_ref,
                         w1_ref, b1_ref, w2_ref, b2_ref, ln2g_ref, ln2b_ref,
                         out_ref, attn_ref):
    """One grid step == Bb batch elements. Everything lives in VMEM."""
    Bb, S, D = x_ref.shape
    H, DK = N_HEADS, D_K
    HD = H * DK
    bf16 = jnp.bfloat16

    x = x_ref[...].reshape(Bb * S, D)          # f32 residual path
    xb = x.astype(bf16)                        # bf16 MXU operand

    # Fused Q/K/V projection: one (Bb*S, D) x (D, 3*H*DK) matmul on the whole
    # block slab (nn.Linear: y = x @ W^T + b; weights stored pre-transposed;
    # the 1/sqrt(D_K) scale is folded into the Q slice of the fused weight/bias).
    qkv = jnp.dot(xb, wqkv_ref[...],
                  preferred_element_type=jnp.float32) + bqkv_ref[...]
    q = qkv[:, 0 * HD:1 * HD].reshape(Bb, S, HD)
    k = qkv[:, 1 * HD:2 * HD].reshape(Bb, S, HD)
    v = qkv[:, 2 * HD:3 * HD].reshape(Bb, S, HD)

    def to_heads(t):
        """(Bb, S, H*DK) f32 -> (Bb*H, S, DK) bf16 (single fused batch dim)."""
        tb = t.astype(bf16)
        th = jnp.stack([tb[:, :, h * DK:(h + 1) * DK] for h in range(H)], axis=1)
        return th.reshape(Bb * H, S, DK)

    qh, kh, vh = to_heads(q), to_heads(k), to_heads(v)

    # One batched score matmul for all (batch, head) pairs, f32 accumulation.
    scores = jnp.einsum('bqd,bkd->bqk', qh, kh,
                        preferred_element_type=jnp.float32)          # (Bb*H, S, S)
    # Additive mask (-1e9 on padded keys), broadcast over heads in-kernel so the
    # HBM mask traffic stays (B, S, S) rather than (B, H, S, S).
    scores = scores.reshape(Bb, H, S, S) + mask_ref[...][:, None]

    # Softmax in f32; reciprocal goes to the (otherwise idle) EUP slot.
    m = jnp.max(scores, axis=-1, keepdims=True)
    p = jnp.exp(scores - m)
    denom = jnp.sum(p, axis=-1, keepdims=True)
    attn = p * pl.reciprocal(denom, approx=True)                     # (Bb, H, S, S)

    attn_ref[...] = attn       # single all-heads / all-batch store per grid step
    # TODO(synk): at reference sizes (S=2048) the (B,H,S,S) attn output dominates
    # HBM traffic; emit it in bf16 / tiled over the key dim (or drop it) to keep
    # the kernel MXU-bound.

    # One batched context matmul for all (batch, head) pairs.
    ctx = jnp.einsum('bqk,bkd->bqd',
                     attn.reshape(Bb * H, S, S).astype(bf16), vh,
                     preferred_element_type=jnp.float32)             # (Bb*H, S, DK)
    ctx = ctx.reshape(Bb, H, S, DK)
    context = jnp.concatenate([ctx[:, h] for h in range(H)], axis=-1)  # (Bb, S, HD)
    context = context.reshape(Bb * S, HD)

    # Output projection + residual + LayerNorm (f32 elementwise).
    mha = jnp.dot(context.astype(bf16), wo_ref[...],
                  preferred_element_type=jnp.float32) + bo_ref[...]
    res1 = _layernorm(mha + x, ln1g_ref[...], ln1b_ref[...])

    # Position-wise FFN: Conv1d(k=1) -> ReLU -> Conv1d(k=1) -> residual -> LayerNorm.
    h1 = jnp.dot(res1.astype(bf16), w1_ref[...],
                 preferred_element_type=jnp.float32) + b1_ref[...]
    h1 = jnp.maximum(h1, 0.0)
    ffn = jnp.dot(h1.astype(bf16), w2_ref[...],
                  preferred_element_type=jnp.float32) + b2_ref[...]
    out = _layernorm(ffn + res1, ln2g_ref[...], ln2b_ref[...])

    out_ref[...] = out.reshape(Bb, S, D)


def make_params(key):
    ks = jax.random.split(key, 8)

    def lin(k, din, dout, scale=0.05):
        kw, kb = jax.random.split(k)
        w = jax.random.normal(kw, (din, dout), jnp.float32) * scale
        b = jax.random.normal(kb, (1, dout), jnp.float32) * scale
        return w, b

    wq, bq = lin(ks[0], D_MODEL, N_HEADS * D_K)
    wk, bk = lin(ks[1], D_MODEL, N_HEADS * D_K)
    wv, bv = lin(ks[2], D_MODEL, N_HEADS * D_K)
    wo, bo = lin(ks[3], N_HEADS * D_K, D_MODEL)
    w1, b1 = lin(ks[4], D_MODEL, D_FF)       # conv1 (kernel_size=1)
    w2, b2 = lin(ks[5], D_FF, D_MODEL)       # conv2 (kernel_size=1)
    ln1g = jnp.ones((1, D_MODEL), jnp.float32)   # PyTorch LayerNorm default init
    ln1b = jnp.zeros((1, D_MODEL), jnp.float32)
    ln2g = jnp.ones((1, D_MODEL), jnp.float32)
    ln2b = jnp.zeros((1, D_MODEL), jnp.float32)
    return (wq, bq, wk, bk, wv, bv, wo, bo, ln1g, ln1b,
            w1, b1, w2, b2, ln2g, ln2b)


def _pick_block_batch(B, S, target_rows=256):
    """Largest divisor of B whose block has <= target_rows rows (Bb*S) and that
    keeps >= 2 grid steps whenever B > 1 (so the parallel grid axis can be
    sharded across both v7x TensorCores)."""
    bb = 1
    for cand in range(1, B + 1):
        if B % cand:
            continue
        if cand * S > max(target_rows, S):
            continue
        if B > 1 and B // cand < 2:
            continue
        bb = cand
    return bb


def encoder_layer(enc_inputs, enc_self_attn_mask, params):
    B, S, D = enc_inputs.shape
    assert D == D_MODEL
    (wq, bq, wk, bk, wv, bv, wo, bo, ln1g, ln1b,
     w1, b1, w2, b2, ln2g, ln2b) = params

    # One-time (outside-kernel) parameter prep: fuse Q/K/V into a single weight,
    # fold the 1/sqrt(D_K) scale into its Q slice, and cast matmul weights to
    # bf16 (biases / LN params stay f32).
    scale = jnp.float32(1.0 / math.sqrt(D_K))
    bf = jnp.bfloat16
    w_qkv = jnp.concatenate([wq * scale, wk, wv], axis=1).astype(bf)   # (D, 3*H*DK)
    b_qkv = jnp.concatenate([bq * scale, bk, bv], axis=1)              # (1, 3*H*DK)

    kparams = (w_qkv, b_qkv,
               wo.astype(bf), bo, ln1g, ln1b,
               w1.astype(bf), b1, w2.astype(bf), b2, ln2g, ln2b)

    # Additive attention mask (masked_fill_(-1e9) equivalent), prepared once
    # outside the kernel instead of a per-head compare+select inside it.
    mask_add = enc_self_attn_mask.astype(jnp.float32) * jnp.float32(-1e9)

    # Fold batch elements per grid step so the per-step pipeline overhead is
    # amortised and the MXU sees large M, while keeping >= 2 parallel steps.
    Bb = _pick_block_batch(B, S)
    grid = (B // Bb,)

    def batch_spec(shape):
        return pl.BlockSpec(shape, lambda b: (b,) + (0,) * (len(shape) - 1))

    def rep_spec(shape):
        return pl.BlockSpec(shape, lambda b, _n=len(shape): (0,) * _n)

    in_specs = [batch_spec((Bb, S, S)),          # additive mask
                batch_spec((Bb, S, D))]          # x
    in_specs += [rep_spec(p.shape) for p in kparams]

    out_shape = (jax.ShapeDtypeStruct((B, S, D), jnp.float32),
                 jax.ShapeDtypeStruct((B, N_HEADS, S, S), jnp.float32))
    out_specs = (batch_spec((Bb, S, D)),
                 batch_spec((Bb, N_HEADS, S, S)))

    return pl.pallas_call(
        encoder_layer_kernel,
        out_shape=out_shape,
        grid_spec=pltpu.PrefetchScalarGridSpec(
            num_scalar_prefetch=0,
            grid=grid,
            in_specs=in_specs,
            out_specs=out_specs,
        ),
        compiler_params=pltpu.CompilerParams(
            dimension_semantics=("parallel",)),
    )(mask_add, enc_inputs, *kparams)


def encoder_layer_ref(x, mask, params):
    """Pure-JAX f32 reference (mirrors the PyTorch forward) for a correctness check."""
    (wq, bq, wk, bk, wv, bv, wo, bo, ln1g, ln1b,
     w1, b1, w2, b2, ln2g, ln2b) = params
    B, S, D = x.shape
    q = (x @ wq + bq).reshape(B, S, N_HEADS, D_K).transpose(0, 2, 1, 3)
    k = (x @ wk + bk).reshape(B, S, N_HEADS, D_K).transpose(0, 2, 1, 3)
    v = (x @ wv + bv).reshape(B, S, N_HEADS, D_K).transpose(0, 2, 1, 3)
    scores = jnp.einsum("bhqd,bhkd->bhqk", q, k) / math.sqrt(D_K)
    scores = jnp.where(mask[:, None] > 0.5, -1e9, scores)
    attn = jax.nn.softmax(scores, axis=-1)
    ctx = jnp.einsum("bhqk,bhkd->bhqd", attn, v).transpose(0, 2, 1, 3).reshape(B, S, -1)
    out = ctx @ wo + bo
    out = _layernorm(out + x, ln1g, ln1b)
    h1 = jnp.maximum(out @ w1 + b1, 0.0)
    ffn = h1 @ w2 + b2
    return _layernorm(ffn + out, ln2g, ln2b), attn


if __name__ == "__main__":
    B, S = 2, 8
    key = jax.random.PRNGKey(0)
    k_x, k_p = jax.random.split(key)

    x = jax.random.normal(k_x, (B, S, D_MODEL), jnp.float32)

    # Pad-style self-attention mask: 1.0 where the KEY position is padding.
    # Batch 0: no padding; batch 1: last two key positions padded.
    key_pad = jnp.zeros((B, S), jnp.float32).at[1, S - 2:].set(1.0)
    enc_self_attn_mask = jnp.broadcast_to(key_pad[:, None, :], (B, S, S))

    params = make_params(k_p)

    enc_out, attn = encoder_layer(x, enc_self_attn_mask, params)
    jax.block_until_ready((enc_out, attn))

    ref_out, ref_attn = encoder_layer_ref(x, enc_self_attn_mask, params)
    assert enc_out.shape == (B, S, D_MODEL)
    assert attn.shape == (B, N_HEADS, S, S)
    # Tolerances account for bf16 MXU operands + approximate softmax reciprocal
    # in the kernel vs. the pure-f32 reference.
    assert jnp.allclose(enc_out, ref_out, rtol=5e-2, atol=5e-2)
    assert jnp.allclose(attn, ref_attn, rtol=2e-2, atol=2e-2)

    print("KERNEL_OK")
</pallas_src>

<mosaic_0001>
module attributes {stable_mosaic.version = 11 : i64} {
  func.func @encoder_layer_kernel(%arg0: i32, %arg1: memref<1x8x8xf32, #tpu.memory_space<vmem>>, %arg2: memref<1x8x32xf32, #tpu.memory_space<vmem>>, %arg3: memref<32x96xbf16, #tpu.memory_space<vmem>>, %arg4: memref<1x96xf32, #tpu.memory_space<vmem>>, %arg5: memref<32x32xbf16, #tpu.memory_space<vmem>>, %arg6: memref<1x32xf32, #tpu.memory_space<vmem>>, %arg7: memref<1x32xf32, #tpu.memory_space<vmem>>, %arg8: memref<1x32xf32, #tpu.memory_space<vmem>>, %arg9: memref<32x64xbf16, #tpu.memory_space<vmem>>, %arg10: memref<1x64xf32, #tpu.memory_space<vmem>>, %arg11: memref<64x32xbf16, #tpu.memory_space<vmem>>, %arg12: memref<1x32xf32, #tpu.memory_space<vmem>>, %arg13: memref<1x32xf32, #tpu.memory_space<vmem>>, %arg14: memref<1x32xf32, #tpu.memory_space<vmem>>, %arg15: memref<1x8x32xf32, #tpu.memory_space<vmem>>, %arg16: memref<1x4x8x8xf32, #tpu.memory_space<vmem>>) attributes {dimension_semantics = [#tpu.dimension_semantics<parallel>], iteration_bounds = array<i64: 2>, scalar_prefetch = 0 : i64, scratch_operands = 0 : i64, tpu.core_type = #tpu.core_type<tc>, window_params = [{transform_indices = @transform_0, window_bounds = array<i64: 1, 8, 8>}, {transform_indices = @transform_1, window_bounds = array<i64: 1, 8, 32>}, {pipeline_mode = #tpu.pipeline_mode<synchronous>, transform_indices = @transform_2, window_bounds = array<i64: 32, 96>}, {pipeline_mode = #tpu.pipeline_mode<synchronous>, transform_indices = @transform_3, window_bounds = array<i64: 1, 96>}, {pipeline_mode = #tpu.pipeline_mode<synchronous>, transform_indices = @transform_4, window_bounds = array<i64: 32, 32>}, {pipeline_mode = #tpu.pipeline_mode<synchronous>, transform_indices = @transform_5, window_bounds = array<i64: 1, 32>}, {pipeline_mode = #tpu.pipeline_mode<synchronous>, transform_indices = @transform_6, window_bounds = array<i64: 1, 32>}, {pipeline_mode = #tpu.pipeline_mode<synchronous>, transform_indices = @transform_7, window_bounds = array<i64: 1, 32>}, {pipeline_mode = #tpu.pipeline_mode<synchronous>, transform_indices = @transform_8, window_bounds = array<i64: 32, 64>}, {pipeline_mode = #tpu.pipeline_mode<synchronous>, transform_indices = @transform_9, window_bounds = array<i64: 1, 64>}, {pipeline_mode = #tpu.pipeline_mode<synchronous>, transform_indices = @transform_10, window_bounds = array<i64: 64, 32>}, {pipeline_mode = #tpu.pipeline_mode<synchronous>, transform_indices = @transform_11, window_bounds = array<i64: 1, 32>}, {pipeline_mode = #tpu.pipeline_mode<synchronous>, transform_indices = @transform_12, window_bounds = array<i64: 1, 32>}, {pipeline_mode = #tpu.pipeline_mode<synchronous>, transform_indices = @transform_13, window_bounds = array<i64: 1, 32>}, {transform_indices = @transform_14, window_bounds = array<i64: 1, 8, 32>}, {transform_indices = @transform_15, window_bounds = array<i64: 1, 4, 8, 8>}]} {
    %c0 = arith.constant 0 : index
    %c0_0 = arith.constant 0 : index
    %c0_1 = arith.constant 0 : index
    %0 = vector.load %arg2[%c0, %c0_0, %c0_1] : memref<1x8x32xf32, #tpu.memory_space<vmem>>, vector<1x8x32xf32>
    %1 = vector.shape_cast %0 : vector<1x8x32xf32> to vector<8x32xf32>
    %2 = arith.truncf %1 : vector<8x32xf32> to vector<8x32xbf16>
    %c0_2 = arith.constant 0 : index
    %c0_3 = arith.constant 0 : index
    %3 = vector.load %arg3[%c0_2, %c0_3] : memref<32x96xbf16, #tpu.memory_space<vmem>>, vector<32x96xbf16>
    %cst = arith.constant dense<0.000000e+00> : vector<8x96xf32>
    %4 = tpu.matmul %2, %3, %cst {dimension_numbers = #tpu.dot_dimension_numbers<[1], [0], [0], [1], [0, 0, 1, 1], [], []>} : vector<8x32xbf16>, vector<32x96xbf16>, vector<8x96xf32> -> vector<8x96xf32>
    %c0_4 = arith.constant 0 : index
    %c0_5 = arith.constant 0 : index
    %5 = vector.load %arg4[%c0_4, %c0_5] : memref<1x96xf32, #tpu.memory_space<vmem>>, vector<1x96xf32>
    %6 = vector.broadcast %5 : vector<1x96xf32> to vector<8x96xf32>
    %7 = arith.addf %4, %6 : vector<8x96xf32>
    %8 = vector.extract_strided_slice %7 {offsets = [0, 0], sizes = [8, 32], strides = [1, 1]} : vector<8x96xf32> to vector<8x32xf32>
    %9 = vector.shape_cast %8 : vector<8x32xf32> to vector<1x8x32xf32>
    %10 = vector.extract_strided_slice %7 {offsets = [0, 32], sizes = [8, 32], strides = [1, 1]} : vector<8x96xf32> to vector<8x32xf32>
    %11 = vector.shape_cast %10 : vector<8x32xf32> to vector<1x8x32xf32>
    %12 = vector.extract_strided_slice %7 {offsets = [0, 64], sizes = [8, 32], strides = [1, 1]} : vector<8x96xf32> to vector<8x32xf32>
    %13 = vector.shape_cast %12 : vector<8x32xf32> to vector<1x8x32xf32>
    %14 = arith.truncf %9 : vector<1x8x32xf32> to vector<1x8x32xbf16>
    %15 = vector.extract_strided_slice %14 {offsets = [0, 0, 0], sizes = [1, 8, 8], strides = [1, 1, 1]} : vector<1x8x32xbf16> to vector<1x8x8xbf16>
    %16 = vector.extract_strided_slice %14 {offsets = [0, 0, 8], sizes = [1, 8, 8], strides = [1, 1, 1]} : vector<1x8x32xbf16> to vector<1x8x8xbf16>
    %17 = vector.extract_strided_slice %14 {offsets = [0, 0, 16], sizes = [1, 8, 8], strides = [1, 1, 1]} : vector<1x8x32xbf16> to vector<1x8x8xbf16>
    %18 = vector.extract_strided_slice %14 {offsets = [0, 0, 24], sizes = [1, 8, 8], strides = [1, 1, 1]} : vector<1x8x32xbf16> to vector<1x8x8xbf16>
    %19 = vector.shape_cast %15 : vector<1x8x8xbf16> to vector<1x1x8x8xbf16>
    %20 = vector.shape_cast %16 : vector<1x8x8xbf16> to vector<1x1x8x8xbf16>
    %21 = vector.shape_cast %17 : vector<1x8x8xbf16> to vector<1x1x8x8xbf16>
    %22 = vector.shape_cast %18 : vector<1x8x8xbf16> to vector<1x1x8x8xbf16>
    %23 = tpu.concatenate %19, %20, %21, %22 in 1 : vector<1x1x8x8xbf16>, vector<1x1x8x8xbf16>, vector<1x1x8x8xbf16>, vector<1x1x8x8xbf16> -> vector<1x4x8x8xbf16>
    %24 = vector.shape_cast %23 : vector<1x4x8x8xbf16> to vector<4x8x8xbf16>
    %25 = arith.truncf %11 : vector<1x8x32xf32> to vector<1x8x32xbf16>
    %26 = vector.extract_strided_slice %25 {offsets = [0, 0, 0], sizes = [1, 8, 8], strides = [1, 1, 1]} : vector<1x8x32xbf16> to vector<1x8x8xbf16>
    %27 = vector.extract_strided_slice %25 {offsets = [0, 0, 8], sizes = [1, 8, 8], strides = [1, 1, 1]} : vector<1x8x32xbf16> to vector<1x8x8xbf16>
    %28 = vector.extract_strided_slice %25 {offsets = [0, 0, 16], sizes = [1, 8, 8], strides = [1, 1, 1]} : vector<1x8x32xbf16> to vector<1x8x8xbf16>
    %29 = vector.extract_strided_slice %25 {offsets = [0, 0, 24], sizes = [1, 8, 8], strides = [1, 1, 1]} : vector<1x8x32xbf16> to vector<1x8x8xbf16>
    %30 = vector.shape_cast %26 : vector<1x8x8xbf16> to vector<1x1x8x8xbf16>
    %31 = vector.shape_cast %27 : vector<1x8x8xbf16> to vector<1x1x8x8xbf16>
    %32 = vector.shape_cast %28 : vector<1x8x8xbf16> to vector<1x1x8x8xbf16>
    %33 = vector.shape_cast %29 : vector<1x8x8xbf16> to vector<1x1x8x8xbf16>
    %34 = tpu.concatenate %30, %31, %32, %33 in 1 : vector<1x1x8x8xbf16>, vector<1x1x8x8xbf16>, vector<1x1x8x8xbf16>, vector<1x1x8x8xbf16> -> vector<1x4x8x8xbf16>
    %35 = vector.shape_cast %34 : vector<1x4x8x8xbf16> to vector<4x8x8xbf16>
    %36 = arith.truncf %13 : vector<1x8x32xf32> to vector<1x8x32xbf16>
    %37 = vector.extract_strided_slice %36 {offsets = [0, 0, 0], sizes = [1, 8, 8], strides = [1, 1, 1]} : vector<1x8x32xbf16> to vector<1x8x8xbf16>
    %38 = vector.extract_strided_slice %36 {offsets = [0, 0, 8], sizes = [1, 8, 8], strides = [1, 1, 1]} : vector<1x8x32xbf16> to vector<1x8x8xbf16>
    %39 = vector.extract_strided_slice %36 {offsets = [0, 0, 16], sizes = [1, 8, 8], strides = [1, 1, 1]} : vector<1x8x32xbf16> to vector<1x8x8xbf16>
    %40 = vector.extract_strided_slice %36 {offsets = [0, 0, 24], sizes = [1, 8, 8], strides = [1, 1, 1]} : vector<1x8x32xbf16> to vector<1x8x8xbf16>
    %41 = vector.shape_cast %37 : vector<1x8x8xbf16> to vector<1x1x8x8xbf16>
    %42 = vector.shape_cast %38 : vector<1x8x8xbf16> to vector<1x1x8x8xbf16>
    %43 = vector.shape_cast %39 : vector<1x8x8xbf16> to vector<1x1x8x8xbf16>
    %44 = vector.shape_cast %40 : vector<1x8x8xbf16> to vector<1x1x8x8xbf16>
    %45 = tpu.concatenate %41, %42, %43, %44 in 1 : vector<1x1x8x8xbf16>, vector<1x1x8x8xbf16>, vector<1x1x8x8xbf16>, vector<1x1x8x8xbf16> -> vector<1x4x8x8xbf16>
    %46 = vector.shape_cast %45 : vector<1x4x8x8xbf16> to vector<4x8x8xbf16>
    "tpu.trace_start"() <{level = 10 : i32, message = "bqd,bkd->bqk"}> : () -> ()
    %cst_6 = arith.constant dense<0.000000e+00> : vector<4x8x8xf32>
    %47 = tpu.matmul %24, %35, %cst_6 {dimension_numbers = #tpu.dot_dimension_numbers<[2], [2], [1], [1], [0, 0, 0, 1, 1, 1], [0], [0]>} : vector<4x8x8xbf16>, vector<4x8x8xbf16>, vector<4x8x8xf32> -> vector<4x8x8xf32>
    "tpu.trace_stop"() : () -> ()
    %48 = vector.shape_cast %47 : vector<4x8x8xf32> to vector<1x4x8x8xf32>
    %c0_7 = arith.constant 0 : index
    %c0_8 = arith.constant 0 : index
    %c0_9 = arith.constant 0 : index
    %49 = vector.load %arg1[%c0_7, %c0_8, %c0_9] : memref<1x8x8xf32, #tpu.memory_space<vmem>>, vector<1x8x8xf32>
    %50 = vector.shape_cast %49 : vector<1x8x8xf32> to vector<1x1x8x8xf32>
    %51 = vector.broadcast %50 : vector<1x1x8x8xf32> to vector<1x4x8x8xf32>
    %52 = arith.addf %48, %51 : vector<1x4x8x8xf32>
    %cst_10 = arith.constant dense<0xFF800000> : vector<1x4x8xf32>
    %53 = vector.multi_reduction <maximumf>, %52, %cst_10 [3] : vector<1x4x8x8xf32> to vector<1x4x8xf32>
    %54 = vector.shape_cast %53 : vector<1x4x8xf32> to vector<1x4x8x1xf32>
    %55 = vector.broadcast %54 : vector<1x4x8x1xf32> to vector<1x4x8x8xf32>
    %56 = arith.subf %52, %55 : vector<1x4x8x8xf32>
    %57 = math.exp %56 : vector<1x4x8x8xf32>
    %cst_11 = arith.constant dense<0.000000e+00> : vector<1x4x8xf32>
    %58 = vector.multi_reduction <add>, %57, %cst_11 [3] : vector<1x4x8x8xf32> to vector<1x4x8xf32>
    %59 = vector.shape_cast %58 : vector<1x4x8xf32> to vector<1x4x8x1xf32>
    %60 = tpu.reciprocal %59 {approx = true} : vector<1x4x8x1xf32> -> vector<1x4x8x1xf32>
    %61 = vector.broadcast %60 : vector<1x4x8x1xf32> to vector<1x4x8x8xf32>
    %62 = arith.mulf %57, %61 : vector<1x4x8x8xf32>
    %c0_12 = arith.constant 0 : index
    %c0_13 = arith.constant 0 : index
    %c0_14 = arith.constant 0 : index
    %c0_15 = arith.constant 0 : index
    %63 = vector.load %arg16[%c0_12, %c0_13, %c0_14, %c0_15] : memref<1x4x8x8xf32, #tpu.memory_space<vmem>>, vector<1x4x8x8xf32>
    tpu.vector_store %arg16[%c0_12, %c0_13, %c0_14, %c0_15], %62 {strides = array<i32>} : memref<1x4x8x8xf32, #tpu.memory_space<vmem>>, vector<1x4x8x8xf32>,
    %64 = vector.shape_cast %62 : vector<1x4x8x8xf32> to vector<4x8x8xf32>
    %65 = arith.truncf %64 : vector<4x8x8xf32> to vector<4x8x8xbf16>
    "tpu.trace_start"() <{level = 10 : i32, message = "bqk,bkd->bqd"}> : () -> ()
    %cst_16 = arith.constant dense<0.000000e+00> : vector<4x8x8xf32>
    %66 = tpu.matmul %65, %46, %cst_16 {dimension_numbers = #tpu.dot_dimension_numbers<[2], [1], [1], [2], [0, 0, 0, 1, 1, 2], [0], [0]>} : vector<4x8x8xbf16>, vector<4x8x8xbf16>, vector<4x8x8xf32> -> vector<4x8x8xf32>
    "tpu.trace_stop"() : () -> ()
    %67 = vector.shape_cast %66 : vector<4x8x8xf32> to vector<1x4x8x8xf32>
    %68 = vector.extract_strided_slice %67 {offsets = [0, 0, 0, 0], sizes = [1, 1, 8, 8], strides = [1, 1, 1, 1]} : vector<1x4x8x8xf32> to vector<1x1x8x8xf32>
    %69 = vector.shape_cast %68 : vector<1x1x8x8xf32> to vector<1x8x8xf32>
    %70 = vector.extract_strided_slice %67 {offsets = [0, 1, 0, 0], sizes = [1, 1, 8, 8], strides = [1, 1, 1, 1]} : vector<1x4x8x8xf32> to vector<1x1x8x8xf32>
    %71 = vector.shape_cast %70 : vector<1x1x8x8xf32> to vector<1x8x8xf32>
    %72 = vector.extract_strided_slice %67 {offsets = [0, 2, 0, 0], sizes = [1, 1, 8, 8], strides = [1, 1, 1, 1]} : vector<1x4x8x8xf32> to vector<1x1x8x8xf32>
    %73 = vector.shape_cast %72 : vector<1x1x8x8xf32> to vector<1x8x8xf32>
    %74 = vector.extract_strided_slice %67 {offsets = [0, 3, 0, 0], sizes = [1, 1, 8, 8], strides = [1, 1, 1, 1]} : vector<1x4x8x8xf32> to vector<1x1x8x8xf32>
    %75 = vector.shape_cast %74 : vector<1x1x8x8xf32> to vector<1x8x8xf32>
    %76 = tpu.concatenate %69, %71, %73, %75 in 2 : vector<1x8x8xf32>, vector<1x8x8xf32>, vector<1x8x8xf32>, vector<1x8x8xf32> -> vector<1x8x32xf32>
    %77 = vector.shape_cast %76 : vector<1x8x32xf32> to vector<8x32xf32>
    %78 = arith.truncf %77 : vector<8x32xf32> to vector<8x32xbf16>
    %c0_17 = arith.constant 0 : index
    %c0_18 = arith.constant 0 : index
    %79 = vector.load %arg5[%c0_17, %c0_18] : memref<32x32xbf16, #tpu.memory_space<vmem>>, vector<32x32xbf16>
    %cst_19 = arith.constant dense<0.000000e+00> : vector<8x32xf32>
    %80 = tpu.matmul %78, %79, %cst_19 {dimension_numbers = #tpu.dot_dimension_numbers<[1], [0], [0], [1], [0, 0, 1, 1], [], []>} : vector<8x32xbf16>, vector<32x32xbf16>, vector<8x32xf32> -> vector<8x32xf32>
    %c0_20 = arith.constant 0 : index
    %c0_21 = arith.constant 0 : index
    %81 = vector.load %arg6[%c0_20, %c0_21] : memref<1x32xf32, #tpu.memory_space<vmem>>, vector<1x32xf32>
    %82 = vector.broadcast %81 : vector<1x32xf32> to vector<8x32xf32>
    %83 = arith.addf %80, %82 : vector<8x32xf32>
    %84 = arith.addf %83, %1 : vector<8x32xf32>
    %c0_22 = arith.constant 0 : index
    %c0_23 = arith.constant 0 : index
    %85 = vector.load %arg7[%c0_22, %c0_23] : memref<1x32xf32, #tpu.memory_space<vmem>>, vector<1x32xf32>
    %c0_24 = arith.constant 0 : index
    %c0_25 = arith.constant 0 : index
    %86 = vector.load %arg8[%c0_24, %c0_25] : memref<1x32xf32, #tpu.memory_space<vmem>>, vector<1x32xf32>
    %cst_26 = arith.constant dense<0.000000e+00> : vector<8xf32>
    %87 = vector.multi_reduction <add>, %84, %cst_26 [1] : vector<8x32xf32> to vector<8xf32>
    %88 = vector.shape_cast %87 : vector<8xf32> to vector<8x1xf32>
    %cst_27 = arith.constant 3.200000e+01 : f32
    %89 = vector.broadcast %cst_27 : f32 to vector<8x1xf32>
    %90 = arith.divf %88, %89 : vector<8x1xf32>
    %91 = vector.broadcast %90 : vector<8x1xf32> to vector<8x32xf32>
    %92 = arith.subf %84, %91 : vector<8x32xf32>
    %93 = arith.mulf %92, %92 : vector<8x32xf32>
    %cst_28 = arith.constant dense<0.000000e+00> : vector<8xf32>
    %94 = vector.multi_reduction <add>, %93, %cst_28 [1] : vector<8x32xf32> to vector<8xf32>
    %95 = vector.shape_cast %94 : vector<8xf32> to vector<8x1xf32>
    %cst_29 = arith.constant 3.200000e+01 : f32
    %96 = vector.broadcast %cst_29 : f32 to vector<8x1xf32>
    %97 = arith.divf %95, %96 : vector<8x1xf32>
    %98 = vector.broadcast %90 : vector<8x1xf32> to vector<8x32xf32>
    %99 = arith.subf %84, %98 : vector<8x32xf32>
    %cst_30 = arith.constant 9.99999974E-6 : f32
    %100 = vector.broadcast %cst_30 : f32 to vector<8x1xf32>
    %101 = arith.addf %97, %100 : vector<8x1xf32>
    %102 = math.rsqrt %101 : vector<8x1xf32>
    %103 = vector.broadcast %102 : vector<8x1xf32> to vector<8x32xf32>
    %104 = arith.mulf %99, %103 : vector<8x32xf32>
    %105 = vector.broadcast %85 : vector<1x32xf32> to vector<8x32xf32>
    %106 = arith.mulf %104, %105 : vector<8x32xf32>
    %107 = vector.broadcast %86 : vector<1x32xf32> to vector<8x32xf32>
    %108 = arith.addf %106, %107 : vector<8x32xf32>
    %109 = arith.truncf %108 : vector<8x32xf32> to vector<8x32xbf16>
    %c0_31 = arith.constant 0 : index
    %c0_32 = arith.constant 0 : index
    %110 = vector.load %arg9[%c0_31, %c0_32] : memref<32x64xbf16, #tpu.memory_space<vmem>>, vector<32x64xbf16>
    %cst_33 = arith.constant dense<0.000000e+00> : vector<8x64xf32>
    %111 = tpu.matmul %109, %110, %cst_33 {dimension_numbers = #tpu.dot_dimension_numbers<[1], [0], [0], [1], [0, 0, 1, 1], [], []>} : vector<8x32xbf16>, vector<32x64xbf16>, vector<8x64xf32> -> vector<8x64xf32>
    %c0_34 = arith.constant 0 : index
    %c0_35 = arith.constant 0 : index
    %112 = vector.load %arg10[%c0_34, %c0_35] : memref<1x64xf32, #tpu.memory_space<vmem>>, vector<1x64xf32>
    %113 = vector.broadcast %112 : vector<1x64xf32> to vector<8x64xf32>
    %114 = arith.addf %111, %113 : vector<8x64xf32>
    %cst_36 = arith.constant 0.000000e+00 : f32
    %115 = vector.broadcast %cst_36 : f32 to vector<8x64xf32>
    %116 = arith.maximumf %114, %115 : vector<8x64xf32>
    %117 = arith.truncf %116 : vector<8x64xf32> to vector<8x64xbf16>
    %c0_37 = arith.constant 0 : index
    %c0_38 = arith.constant 0 : index
    %118 = vector.load %arg11[%c0_37, %c0_38] : memref<64x32xbf16, #tpu.memory_space<vmem>>, vector<64x32xbf16>
    %cst_39 = arith.constant dense<0.000000e+00> : vector<8x32xf32>
    %119 = tpu.matmul %117, %118, %cst_39 {dimension_numbers = #tpu.dot_dimension_numbers<[1], [0], [0], [1], [0, 0, 1, 1], [], []>} : vector<8x64xbf16>, vector<64x32xbf16>, vector<8x32xf32> -> vector<8x32xf32>
    %c0_40 = arith.constant 0 : index
    %c0_41 = arith.constant 0 : index
    %120 = vector.load %arg12[%c0_40, %c0_41] : memref<1x32xf32, #tpu.memory_space<vmem>>, vector<1x32xf32>
    %121 = vector.broadcast %120 : vector<1x32xf32> to vector<8x32xf32>
    %122 = arith.addf %119, %121 : vector<8x32xf32>
    %123 = arith.addf %122, %108 : vector<8x32xf32>
    %c0_42 = arith.constant 0 : index
    %c0_43 = arith.constant 0 : index
    %124 = vector.load %arg13[%c0_42, %c0_43] : memref<1x32xf32, #tpu.memory_space<vmem>>, vector<1x32xf32>
    %c0_44 = arith.constant 0 : index
    %c0_45 = arith.constant 0 : index
    %125 = vector.load %arg14[%c0_44, %c0_45] : memref<1x32xf32, #tpu.memory_space<vmem>>, vector<1x32xf32>
    %cst_46 = arith.constant dense<0.000000e+00> : vector<8xf32>
    %126 = vector.multi_reduction <add>, %123, %cst_46 [1] : vector<8x32xf32> to vector<8xf32>
    %127 = vector.shape_cast %126 : vector<8xf32> to vector<8x1xf32>
    %cst_47 = arith.constant 3.200000e+01 : f32
    %128 = vector.broadcast %cst_47 : f32 to vector<8x1xf32>
    %129 = arith.divf %127, %128 : vector<8x1xf32>
    %130 = vector.broadcast %129 : vector<8x1xf32> to vector<8x32xf32>
    %131 = arith.subf %123, %130 : vector<8x32xf32>
    %132 = arith.mulf %131, %131 : vector<8x32xf32>
    %cst_48 = arith.constant dense<0.000000e+00> : vector<8xf32>
    %133 = vector.multi_reduction <add>, %132, %cst_48 [1] : vector<8x32xf32> to vector<8xf32>
    %134 = vector.shape_cast %133 : vector<8xf32> to vector<8x1xf32>
    %cst_49 = arith.constant 3.200000e+01 : f32
    %135 = vector.broadcast %cst_49 : f32 to vector<8x1xf32>
    %136 = arith.divf %134, %135 : vector<8x1xf32>
    %137 = vector.broadcast %129 : vector<8x1xf32> to vector<8x32xf32>
    %138 = arith.subf %123, %137 : vector<8x32xf32>
    %cst_50 = arith.constant 9.99999974E-6 : f32
    %139 = vector.broadcast %cst_50 : f32 to vector<8x1xf32>
    %140 = arith.addf %136, %139 : vector<8x1xf32>
    %141 = math.rsqrt %140 : vector<8x1xf32>
    %142 = vector.broadcast %141 : vector<8x1xf32> to vector<8x32xf32>
    %143 = arith.mulf %138, %142 : vector<8x32xf32>
    %144 = vector.broadcast %124 : vector<1x32xf32> to vector<8x32xf32>
    %145 = arith.mulf %143, %144 : vector<8x32xf32>
    %146 = vector.broadcast %125 : vector<1x32xf32> to vector<8x32xf32>
    %147 = arith.addf %145, %146 : vector<8x32xf32>
    %148 = vector.shape_cast %147 : vector<8x32xf32> to vector<1x8x32xf32>
    %c0_51 = arith.constant 0 : index
    %c0_52 = arith.constant 0 : index
    %c0_53 = arith.constant 0 : index
    %149 = vector.load %arg15[%c0_51, %c0_52, %c0_53] : memref<1x8x32xf32, #tpu.memory_space<vmem>>, vector<1x8x32xf32>
    tpu.vector_store %arg15[%c0_51, %c0_52, %c0_53], %148 {strides = array<i32>} : memref<1x8x32xf32, #tpu.memory_space<vmem>>, vector<1x8x32xf32>,
    return
  }
  func.func @transform_0(%arg0: i32) -> (i32, i32, i32) {
    %c0_i32 = arith.constant 0 : i32
    %c0_i32_0 = arith.constant 0 : i32
    %c0_i32_1 = arith.constant 0 : i32
    return %arg0, %c0_i32, %c0_i32_0 : i32, i32, i32
  }
  func.func @transform_1(%arg0: i32) -> (i32, i32, i32) {
    %c0_i32 = arith.constant 0 : i32
    %c0_i32_0 = arith.constant 0 : i32
    %c0_i32_1 = arith.constant 0 : i32
    return %arg0, %c0_i32, %c0_i32_0 : i32, i32, i32
  }
  func.func @transform_2(%arg0: i32) -> (i32, i32) {
    %c0_i32 = arith.constant 0 : i32
    %c0_i32_0 = arith.constant 0 : i32
    %c0_i32_1 = arith.constant 0 : i32
    return %c0_i32, %c0_i32_0 : i32, i32
  }
  func.func @transform_3(%arg0: i32) -> (i32, i32) {
    %c0_i32 = arith.constant 0 : i32
    %c0_i32_0 = arith.constant 0 : i32
    %c0_i32_1 = arith.constant 0 : i32
    return %c0_i32, %c0_i32_0 : i32, i32
  }
  func.func @transform_4(%arg0: i32) -> (i32, i32) {
    %c0_i32 = arith.constant 0 : i32
    %c0_i32_0 = arith.constant 0 : i32
    %c0_i32_1 = arith.constant 0 : i32
    return %c0_i32, %c0_i32_0 : i32, i32
  }
  func.func @transform_5(%arg0: i32) -> (i32, i32) {
    %c0_i32 = arith.constant 0 : i32
    %c0_i32_0 = arith.constant 0 : i32
    %c0_i32_1 = arith.constant 0 : i32
    return %c0_i32, %c0_i32_0 : i32, i32
  }
  func.func @transform_6(%arg0: i32) -> (i32, i32) {
    %c0_i32 = arith.constant 0 : i32
    %c0_i32_0 = arith.constant 0 : i32
    %c0_i32_1 = arith.constant 0 : i32
    return %c0_i32, %c0_i32_0 : i32, i32
  }
  func.func @transform_7(%arg0: i32) -> (i32, i32) {
    %c0_i32 = arith.constant 0 : i32
    %c0_i32_0 = arith.constant 0 : i32
    %c0_i32_1 = arith.constant 0 : i32
    return %c0_i32, %c0_i32_0 : i32, i32
  }
  func.func @transform_8(%arg0: i32) -> (i32, i32) {
    %c0_i32 = arith.constant 0 : i32
    %c0_i32_0 = arith.constant 0 : i32
    %c0_i32_1 = arith.constant 0 : i32
    return %c0_i32, %c0_i32_0 : i32, i32
  }
  func.func @transform_9(%arg0: i32) -> (i32, i32) {
    %c0_i32 = arith.constant 0 : i32
    %c0_i32_0 = arith.constant 0 : i32
    %c0_i32_1 = arith.constant 0 : i32
    return %c0_i32, %c0_i32_0 : i32, i32
  }
  func.func @transform_10(%arg0: i32) -> (i32, i32) {
    %c0_i32 = arith.constant 0 : i32
    %c0_i32_0 = arith.constant 0 : i32
    %c0_i32_1 = arith.constant 0 : i32
    return %c0_i32, %c0_i32_0 : i32, i32
  }
  func.func @transform_11(%arg0: i32) -> (i32, i32) {
    %c0_i32 = arith.constant 0 : i32
    %c0_i32_0 = arith.constant 0 : i32
    %c0_i32_1 = arith.constant 0 : i32
    return %c0_i32, %c0_i32_0 : i32, i32
  }
  func.func @transform_12(%arg0: i32) -> (i32, i32) {
    %c0_i32 = arith.constant 0 : i32
    %c0_i32_0 = arith.constant 0 : i32
    %c0_i32_1 = arith.constant 0 : i32
    return %c0_i32, %c0_i32_0 : i32, i32
  }
  func.func @transform_13(%arg0: i32) -> (i32, i32) {
    %c0_i32 = arith.constant 0 : i32
    %c0_i32_0 = arith.constant 0 : i32
    %c0_i32_1 = arith.constant 0 : i32
    return %c0_i32, %c0_i32_0 : i32, i32
  }
  func.func @transform_14(%arg0: i32) -> (i32, i32, i32) {
    %c0_i32 = arith.constant 0 : i32
    %c0_i32_0 = arith.constant 0 : i32
    %c0_i32_1 = arith.constant 0 : i32
    return %arg0, %c0_i32, %c0_i32_0 : i32, i32, i32
  }
  func.func @transform_15(%arg0: i32) -> (i32, i32, i32, i32) {
    %c0_i32 = arith.constant 0 : i32
    %c0_i32_0 = arith.constant 0 : i32
    %c0_i32_1 = arith.constant 0 : i32
    %c0_i32_2 = arith.constant 0 : i32
    return %arg0, %c0_i32, %c0_i32_0, %c0_i32_1 : i32, i32, i32, i32
  }
}

</mosaic_0001>

<llo_original>
// kernel: tpu_custom_call.1
$region0: #{tpu_custom_call.1}
  #allocation0 [shape = 'u32[]', space=smem, size = 0x4, offset = 0x4, fixed_abs, tag = 'smem constant byte address 0x4 - core index']
  #allocation1 [shape = 'u32[144,128]{1,0:T(1,128)}', space=vmem, size = 0x12000, scoped, tag = 'internal scratch']
  %s0 = inlined_call_operand.vmem [shape: f32[2,8,8], index: 0, kind: input, shape index: {}]
  %s1 = inlined_call_operand.vmem [shape: f32[2,8,32], index: 1, kind: input, shape index: {}]
  %s2 = inlined_call_operand.vmem [shape: bf16[32,96], index: 2, kind: input, shape index: {}]
  %s3 = inlined_call_operand.vmem [shape: f32[1,96], index: 3, kind: input, shape index: {}]
  %s4 = inlined_call_operand.hbm [shape: bf16[32,32], index: 4, kind: input, shape index: {}]
  %s5 = inlined_call_operand.vmem [shape: f32[1,32], index: 5, kind: input, shape index: {}]
  %s6 = inlined_call_operand.vmem [shape: f32[1,32], index: 6, kind: input, shape index: {}]
  %s7 = inlined_call_operand.vmem [shape: f32[1,32], index: 7, kind: input, shape index: {}]
  %s8 = inlined_call_operand.hbm [shape: bf16[32,64], index: 8, kind: input, shape index: {}]
  %s9 = inlined_call_operand.vmem [shape: f32[1,64], index: 9, kind: input, shape index: {}]
  %s10 = inlined_call_operand.vmem [shape: bf16[64,32], index: 10, kind: input, shape index: {}]
  %s11 = inlined_call_operand.vmem [shape: f32[1,32], index: 11, kind: input, shape index: {}]
  %s12 = inlined_call_operand.vmem [shape: f32[1,32], index: 12, kind: input, shape index: {}]
  %s13 = inlined_call_operand.vmem [shape: f32[1,32], index: 13, kind: input, shape index: {}]
  %s14 = inlined_call_operand.hbm [shape: f32[2,8,32], index: 14, kind: output, shape index: {0}]
  %s15 = inlined_call_operand.hbm [shape: f32[2,4,8,8], index: 15, kind: output, shape index: {1}]
  %16 = xla_tuple %s14, %s15
  %s17 = sld [smem:[#allocation0]]
  $region105: #{tpu_custom_call.1} parent=0
    _
  %s19 = ssub.s32 1, %s17
  %s20 = scalar_select 0, %s19, %s17
  $region1: #{tpu_custom_call.1} parent=0
    #allocation2 [shape = 'u8[8192]{0}', space=vmem, size = 0x2000, scoped, tag = 'input window, operand 4, single buffered']
    #allocation3 [shape = 's32[2]{0}', space=sflag, size = 0x8, scoped, tag = 'scoped memory for tpu_custom_call.1']
    #allocation4 [shape = 's32[2]{0}', space=sflag, size = 0x8, scoped, tag = 'scoped memory for tpu_custom_call.1']
    #allocation5 [shape = 'u8[8192]{0}', space=vmem, size = 0x2000, scoped, tag = 'input window, operand 8, single buffered']
    #allocation6 [shape = 's32[1]{0}', space=sflag, size = 0x4, scoped, tag = 'scoped memory for tpu_custom_call.1']
    #allocation7 [shape = 'u8[8192]{0}', space=vmem, size = 0x2000, scoped, tag = 'output window, operand 0']
    #allocation8 [shape = 'u8[32768]{0}', space=vmem, size = 0x8000, scoped, tag = 'output window, operand 1']
    #allocation9 [shape = 's32[2]{0}', space=sflag, size = 0x8, scoped, tag = 'scoped memory for tpu_custom_call.1']
    %21 = vsyncpa [#allocation3], 0
    %22 = vsyncpa [#allocation6], 0
    %23 = vsyncpa [#allocation4], 0
    %s24 = scalar_lea.sflag [#allocation4], 1
    %25 = vsyncpa %s24, 0
    %26 = vsyncpa [#allocation9], 0
    %s27 = scalar_lea.sflag [#allocation9], 1
    %28 = vsyncpa %s27, 0
    loop: start=0, step=1, limit=4
    $region2: #{tpu_custom_call.1} parent=1 // loop_pre_header
      _
    $region3: #{tpu_custom_call.1} parent=1 // loop_header
      %s30 = sphi 0, %s34
      %p31 = scmp.ge.s32.totalorder %s30, 4
      %s40 = sphi 0, %s42
      %s43 = sphi 0, %s40
      %s44 = sphi 0, %s43
      %s60 = sphi 0, %s44
      %s66 = sphi 0, %s68
      %s69 = sphi 0, %s66
      %s70 = sphi 0, %s69
      %s86 = sphi 0, %s70
      %s90 = sphi 0, %s90
      %s92 = sphi 0, %s90
      %s93 = sphi 0, %s92
      %s107 = sphi 0, %s93
      %s111 = sphi 0, %s111
      %s113 = sphi 0, %s111
      %s114 = sphi 0, %s113
      %s128 = sphi 0, %s114
      %s132 = sphi 0, %s132
      %s134 = sphi 0, %s132
      %s135 = sphi 0, %s134
      %s149 = sphi 0, %s135
      %s153 = sphi 0, %s153
      %s155 = sphi 0, %s153
      %s156 = sphi 0, %s155
      %s170 = sphi 0, %s156
      %s174 = sphi 0, %s174
      %s176 = sphi 0, %s174
      %s177 = sphi 0, %s176
      %s191 = sphi 0, %s177
      %s195 = sphi 0, %s195
      %s197 = sphi 0, %s195
      %s198 = sphi 0, %s197
      %s212 = sphi 0, %s198
      %s216 = sphi 0, %s216
      %s218 = sphi 0, %s216
      %s219 = sphi 0, %s218
      %s233 = sphi 0, %s219
      %s237 = sphi 0, %s237
      %s239 = sphi 0, %s237
      %s240 = sphi 0, %s239
      %s254 = sphi 0, %s240
      %s258 = sphi 0, %s258
      %s260 = sphi 0, %s258
      %s261 = sphi 0, %s260
      %s275 = sphi 0, %s261
      %s279 = sphi 0, %s279
      %s281 = sphi 0, %s279
      %s282 = sphi 0, %s281
      %s296 = sphi 0, %s282
      %s300 = sphi 0, %s300
      %s302 = sphi 0, %s300
      %s303 = sphi 0, %s302
      %s317 = sphi 0, %s303
      %s321 = sphi 0, %s321
      %s323 = sphi 0, %s321
      %s324 = sphi 0, %s323
      %s338 = sphi 0, %s324
      %s344 = sphi 0, %s346
      %s347 = sphi 0, %s344
      %s348 = sphi 0, %s347
      %s364 = sphi 0, %s348
      %s370 = sphi 0, %s372
      %s373 = sphi 0, %s370
      %s374 = sphi 0, %s373
      %s390 = sphi 0, %s374
    $region4: #{tpu_custom_call.1} parent=1 // loop_header_branch
      %33 = sbr.rel (%p31) target = $region8
    $region5: #{tpu_custom_call.1} parent=1 // loop_body
      %s35 = ssub.s32 %s30, 1
      %s36 = ssub.s32 %s30, 2
      %s37 = sadd.s32 %s30, 1
      %s38 = ssub.s32 %s30, %s37
      %p39 = scmp.eq.s32.totalorder %s38, 0
      %s41 = sadd.s32 %s40, 1
      %s42 = scalar_select %p39, %s40, %s41
      %p45 = pneg %p39
      %p46 = scmp.eq.s32.totalorder %s30, 1
      %p47 = por %p45, %p46
      %p48 = scmp.ne.s32.totalorder %s40, %s43
      %p49 = scmp.eq.s32.totalorder %s30, 0
      %p50 = por %p48, %p49
      %p51 = scmp.ne.s32.totalorder %s40, %s43
      %p52 = scmp.eq.s32.totalorder %s35, 1
      %p53 = por %p51, %p52
      %p54 = scmp.ne.s32.totalorder %s43, %s44
      %p55 = scmp.eq.s32.totalorder %s35, 0
      %p56 = por %p54, %p55
      %p57 = scmp.ne.s32.totalorder %s43, %s44
      %p58 = scmp.eq.s32.totalorder %s36, 1
      %p59 = por %p57, %p58
      %p61 = scmp.ne.s32.totalorder %s44, %s60
      %p62 = scmp.eq.s32.totalorder %s36, 0
      %p63 = por %p61, %p62
      %s64 = ssub.s32 %s30, %s37
      %p65 = scmp.eq.s32.totalorder %s64, 0
      %s67 = sadd.s32 %s66, 1
      %s68 = scalar_select %p65, %s66, %s67
      %p71 = pneg %p65
      %p72 = scmp.eq.s32.totalorder %s30, 1
      %p73 = por %p71, %p72
      %p74 = scmp.ne.s32.totalorder %s66, %s69
      %p75 = scmp.eq.s32.totalorder %s30, 0
      %p76 = por %p74, %p75
      %p77 = scmp.ne.s32.totalorder %s66, %s69
      %p78 = scmp.eq.s32.totalorder %s35, 1
      %p79 = por %p77, %p78
      %p80 = scmp.ne.s32.totalorder %s69, %s70
      %p81 = scmp.eq.s32.totalorder %s35, 0
      %p82 = por %p80, %p81
      %p83 = scmp.ne.s32.totalorder %s69, %s70
      %p84 = scmp.eq.s32.totalorder %s36, 1
      %p85 = por %p83, %p84
      %p87 = scmp.ne.s32.totalorder %s70, %s86
      %p88 = scmp.eq.s32.totalorder %s36, 0
      %p89 = por %p87, %p88
      %s91 = sadd.s32 %s90, 1
      %p94 = scmp.eq.s32.totalorder %s30, 1
      %p95 = scmp.ne.s32.totalorder %s90, %s92
      %p96 = scmp.eq.s32.totalorder %s30, 0
      %p97 = por %p95, %p96
      %p98 = scmp.ne.s32.totalorder %s90, %s92
      %p99 = scmp.eq.s32.totalorder %s35, 1
      %p100 = por %p98, %p99
      %p101 = scmp.ne.s32.totalorder %s92, %s93
      %p102 = scmp.eq.s32.totalorder %s35, 0
      %p103 = por %p101, %p102
      %p104 = scmp.ne.s32.totalorder %s92, %s93
      %p105 = scmp.eq.s32.totalorder %s36, 1
      %p106 = por %p104, %p105
      %p108 = scmp.ne.s32.totalorder %s93, %s107
      %p109 = scmp.eq.s32.totalorder %s36, 0
      %p110 = por %p108, %p109
      %s112 = sadd.s32 %s111, 1
      %p115 = scmp.eq.s32.totalorder %s30, 1
      %p116 = scmp.ne.s32.totalorder %s111, %s113
      %p117 = scmp.eq.s32.totalorder %s30, 0
      %p118 = por %p116, %p117
      %p119 = scmp.ne.s32.totalorder %s111, %s113
      %p120 = scmp.eq.s32.totalorder %s35, 1
      %p121 = por %p119, %p120
      %p122 = scmp.ne.s32.totalorder %s113, %s114
      %p123 = scmp.eq.s32.totalorder %s35, 0
      %p124 = por %p122, %p123
      %p125 = scmp.ne.s32.totalorder %s113, %s114
      %p126 = scmp.eq.s32.totalorder %s36, 1
      %p127 = por %p125, %p126
      %p129 = scmp.ne.s32.totalorder %s114, %s128
      %p130 = scmp.eq.s32.totalorder %s36, 0
      %p131 = por %p129, %p130
      %s133 = sadd.s32 %s132, 1
      %p136 = scmp.eq.s32.totalorder %s30, 1
      %p137 = scmp.ne.s32.totalorder %s132, %s134
      %p138 = scmp.eq.s32.totalorder %s30, 0
      %p139 = por %p137, %p138
      %p140 = scmp.ne.s32.totalorder %s132, %s134
      %p141 = scmp.eq.s32.totalorder %s35, 1
      %p142 = por %p140, %p141
      %p143 = scmp.ne.s32.totalorder %s134, %s135
      %p144 = scmp.eq.s32.totalorder %s35, 0
      %p145 = por %p143, %p144
      %p146 = scmp.ne.s32.totalorder %s134, %s135
      %p147 = scmp.eq.s32.totalorder %s36, 1
      %p148 = por %p146, %p147
      %p150 = scmp.ne.s32.totalorder %s135, %s149
      %p151 = scmp.eq.s32.totalorder %s36, 0
      %p152 = por %p150, %p151
      %s154 = sadd.s32 %s153, 1
      %p157 = scmp.eq.s32.totalorder %s30, 1
      %p158 = scmp.ne.s32.totalorder %s153, %s155
      %p159 = scmp.eq.s32.totalorder %s30, 0
      %p160 = por %p158, %p159
      %p161 = scmp.ne.s32.totalorder %s153, %s155
      %p162 = scmp.eq.s32.totalorder %s35, 1
      %p163 = por %p161, %p162
      %p164 = scmp.ne.s32.totalorder %s155, %s156
      %p165 = scmp.eq.s32.totalorder %s35, 0
      %p166 = por %p164, %p165
      %p167 = scmp.ne.s32.totalorder %s155, %s156
      %p168 = scmp.eq.s32.totalorder %s36, 1
      %p169 = por %p167, %p168
      %p171 = scmp.ne.s32.totalorder %s156, %s170
      %p172 = scmp.eq.s32.totalorder %s36, 0
      %p173 = por %p171, %p172
      %s175 = sadd.s32 %s174, 1
      %p178 = scmp.eq.s32.totalorder %s30, 1
      %p179 = scmp.ne.s32.totalorder %s174, %s176
      %p180 = scmp.eq.s32.totalorder %s30, 0
      %p181 = por %p179, %p180
      %p182 = scmp.ne.s32.totalorder %s174, %s176
      %p183 = scmp.eq.s32.totalorder %s35, 1
      %p184 = por %p182, %p183
      %p185 = scmp.ne.s32.totalorder %s176, %s177
      %p186 = scmp.eq.s32.totalorder %s35, 0
      %p187 = por %p185, %p186
      %p188 = scmp.ne.s32.totalorder %s176, %s177
      %p189 = scmp.eq.s32.totalorder %s36, 1
      %p190 = por %p188, %p189
      %p192 = scmp.ne.s32.totalorder %s177, %s191
      %p193 = scmp.eq.s32.totalorder %s36, 0
      %p194 = por %p192, %p193
      %s196 = sadd.s32 %s195, 1
      %p199 = scmp.eq.s32.totalorder %s30, 1
      %p200 = scmp.ne.s32.totalorder %s195, %s197
      %p201 = scmp.eq.s32.totalorder %s30, 0
      %p202 = por %p200, %p201
      %p203 = scmp.ne.s32.totalorder %s195, %s197
      %p204 = scmp.eq.s32.totalorder %s35, 1
      %p205 = por %p203, %p204
      %p206 = scmp.ne.s32.totalorder %s197, %s198
      %p207 = scmp.eq.s32.totalorder %s35, 0
      %p208 = por %p206, %p207
      %p209 = scmp.ne.s32.totalorder %s197, %s198
      %p210 = scmp.eq.s32.totalorder %s36, 1
      %p211 = por %p209, %p210
      %p213 = scmp.ne.s32.totalorder %s198, %s212
      %p214 = scmp.eq.s32.totalorder %s36, 0
      %p215 = por %p213, %p214
      %s217 = sadd.s32 %s216, 1
      %p220 = scmp.eq.s32.totalorder %s30, 1
      %p221 = scmp.ne.s32.totalorder %s216, %s218
      %p222 = scmp.eq.s32.totalorder %s30, 0
      %p223 = por %p221, %p222
      %p224 = scmp.ne.s32.totalorder %s216, %s218
      %p225 = scmp.eq.s32.totalorder %s35, 1
      %p226 = por %p224, %p225
      %p227 = scmp.ne.s32.totalorder %s218, %s219
      %p228 = scmp.eq.s32.totalorder %s35, 0
      %p229 = por %p227, %p228
      %p230 = scmp.ne.s32.totalorder %s218, %s219
      %p231 = scmp.eq.s32.totalorder %s36, 1
      %p232 = por %p230, %p231
      %p234 = scmp.ne.s32.totalorder %s219, %s233
      %p235 = scmp.eq.s32.totalorder %s36, 0
      %p236 = por %p234, %p235
      %s238 = sadd.s32 %s237, 1
      %p241 = scmp.eq.s32.totalorder %s30, 1
      %p242 = scmp.ne.s32.totalorder %s237, %s239
      %p243 = scmp.eq.s32.totalorder %s30, 0
      %p244 = por %p242, %p243
      %p245 = scmp.ne.s32.totalorder %s237, %s239
      %p246 = scmp.eq.s32.totalorder %s35, 1
      %p247 = por %p245, %p246
      %p248 = scmp.ne.s32.totalorder %s239, %s240
      %p249 = scmp.eq.s32.totalorder %s35, 0
      %p250 = por %p248, %p249
      %p251 = scmp.ne.s32.totalorder %s239, %s240
      %p252 = scmp.eq.s32.totalorder %s36, 1
      %p253 = por %p251, %p252
      %p255 = scmp.ne.s32.totalorder %s240, %s254
      %p256 = scmp.eq.s32.totalorder %s36, 0
      %p257 = por %p255, %p256
      %s259 = sadd.s32 %s258, 1
      %p262 = scmp.eq.s32.totalorder %s30, 1
      %p263 = scmp.ne.s32.totalorder %s258, %s260
      %p264 = scmp.eq.s32.totalorder %s30, 0
      %p265 = por %p263, %p264
      %p266 = scmp.ne.s32.totalorder %s258, %s260
      %p267 = scmp.eq.s32.totalorder %s35, 1
      %p268 = por %p266, %p267
      %p269 = scmp.ne.s32.totalorder %s260, %s261
      %p270 = scmp.eq.s32.totalorder %s35, 0
      %p271 = por %p269, %p270
      %p272 = scmp.ne.s32.totalorder %s260, %s261
      %p273 = scmp.eq.s32.totalorder %s36, 1
      %p274 = por %p272, %p273
      %p276 = scmp.ne.s32.totalorder %s261, %s275
      %p277 = scmp.eq.s32.totalorder %s36, 0
      %p278 = por %p276, %p277
      %s280 = sadd.s32 %s279, 1
      %p283 = scmp.eq.s32.totalorder %s30, 1
      %p284 = scmp.ne.s32.totalorder %s279, %s281
      %p285 = scmp.eq.s32.totalorder %s30, 0
      %p286 = por %p284, %p285
      %p287 = scmp.ne.s32.totalorder %s279, %s281
      %p288 = scmp.eq.s32.totalorder %s35, 1
      %p289 = por %p287, %p288
      %p290 = scmp.ne.s32.totalorder %s281, %s282
      %p291 = scmp.eq.s32.totalorder %s35, 0
      %p292 = por %p290, %p291
      %p293 = scmp.ne.s32.totalorder %s281, %s282
      %p294 = scmp.eq.s32.totalorder %s36, 1
      %p295 = por %p293, %p294
      %p297 = scmp.ne.s32.totalorder %s282, %s296
      %p298 = scmp.eq.s32.totalorder %s36, 0
      %p299 = por %p297, %p298
      %s301 = sadd.s32 %s300, 1
      %p304 = scmp.eq.s32.totalorder %s30, 1
      %p305 = scmp.ne.s32.totalorder %s300, %s302
      %p306 = scmp.eq.s32.totalorder %s30, 0
      %p307 = por %p305, %p306
      %p308 = scmp.ne.s32.totalorder %s300, %s302
      %p309 = scmp.eq.s32.totalorder %s35, 1
      %p310 = por %p308, %p309
      %p311 = scmp.ne.s32.totalorder %s302, %s303
      %p312 = scmp.eq.s32.totalorder %s35, 0
      %p313 = por %p311, %p312
      %p314 = scmp.ne.s32.totalorder %s302, %s303
      %p315 = scmp.eq.s32.totalorder %s36, 1
      %p316 = por %p314, %p315
      %p318 = scmp.ne.s32.totalorder %s303, %s317
      %p319 = scmp.eq.s32.totalorder %s36, 0
      %p320 = por %p318, %p319
      %s322 = sadd.s32 %s321, 1
      %p325 = scmp.eq.s32.totalorder %s30, 1
      %p326 = scmp.ne.s32.totalorder %s321, %s323
      %p327 = scmp.eq.s32.totalorder %s30, 0
      %p328 = por %p326, %p327
      %p329 = scmp.ne.s32.totalorder %s321, %s323
      %p330 = scmp.eq.s32.totalorder %s35, 1
      %p331 = por %p329, %p330
      %p332 = scmp.ne.s32.totalorder %s323, %s324
      %p333 = scmp.eq.s32.totalorder %s35, 0
      %p334 = por %p332, %p333
      %p335 = scmp.ne.s32.totalorder %s323, %s324
      %p336 = scmp.eq.s32.totalorder %s36, 1
      %p337 = por %p335, %p336
      %p339 = scmp.ne.s32.totalorder %s324, %s338
      %p340 = scmp.eq.s32.totalorder %s36, 0
      %p341 = por %p339, %p340
      %s342 = ssub.s32 %s30, %s37
      %p343 = scmp.eq.s32.totalorder %s342, 0
      %s345 = sadd.s32 %s344, 1
      %s346 = scalar_select %p343, %s344, %s345
      %p349 = pneg %p343
      %p350 = scmp.eq.s32.totalorder %s30, 1
      %p351 = por %p349, %p350
      %p352 = scmp.ne.s32.totalorder %s344, %s347
      %p353 = scmp.eq.s32.totalorder %s30, 0
      %p354 = por %p352, %p353
      %p355 = scmp.ne.s32.totalorder %s344, %s347
      %p356 = scmp.eq.s32.totalorder %s35, 1
      %p357 = por %p355, %p356
      %p358 = scmp.ne.s32.totalorder %s347, %s348
      %p359 = scmp.eq.s32.totalorder %s35, 0
      %p360 = por %p358, %p359
      %p361 = scmp.ne.s32.totalorder %s347, %s348
      %p362 = scmp.eq.s32.totalorder %s36, 1
      %p363 = por %p361, %p362
      %p365 = scmp.ne.s32.totalorder %s348, %s364
      %p366 = scmp.eq.s32.totalorder %s36, 0
      %p367 = por %p365, %p366
      %s368 = ssub.s32 %s30, %s37
      %p369 = scmp.eq.s32.totalorder %s368, 0
      %s371 = sadd.s32 %s370, 1
      %s372 = scalar_select %p369, %s370, %s371
      %p375 = pneg %p369
      %p376 = scmp.eq.s32.totalorder %s30, 1
      %p377 = por %p375, %p376
      %p378 = scmp.ne.s32.totalorder %s370, %s373
      %p379 = scmp.eq.s32.totalorder %s30, 0
      %p380 = por %p378, %p379
      %p381 = scmp.ne.s32.totalorder %s370, %s373
      %p382 = scmp.eq.s32.totalorder %s35, 1
      %p383 = por %p381, %p382
      %p384 = scmp.ne.s32.totalorder %s373, %s374
      %p385 = scmp.eq.s32.totalorder %s35, 0
      %p386 = por %p384, %p385
      %p387 = scmp.ne.s32.totalorder %s373, %s374
      %p388 = scmp.eq.s32.totalorder %s36, 1
      %p389 = por %p387, %p388
      %p391 = scmp.ne.s32.totalorder %s374, %s390
      %p392 = scmp.eq.s32.totalorder %s36, 0
      %p393 = por %p391, %p392
      %p394 = scmp.le.s32.totalorder 1, %s30
      %p395 = scmp.lt.s32.totalorder %s30, 3
      %p396 = pnand %p394, %p395
      %p397 = pneg %p396
      // Predicated region
      $region9: #{tpu_custom_call.1} parent=5 // pred_check
        _
      $region10: #{tpu_custom_call.1} parent=5 // pred_check_branch
        %399 = sbr.rel (%p396) target = $region12
      $region11: #{tpu_custom_call.1} parent=5 // pred_region
        %s400 = ssub.s32 %s30, 1
        // Predicated region
        $region13: #{tpu_custom_call.1} parent=11 // pred_check
          %p401 = pneg %p103
        $region14: #{tpu_custom_call.1} parent=11 // pred_check_branch
          %403 = sbr.rel (%p401) target = $region16
        $region15: #{tpu_custom_call.1} parent=11 // pred_region
          _
        $region16: #{tpu_custom_call.1} parent=11 // pred_fallthru
          _
        // Predicated region
        $region17: #{tpu_custom_call.1} parent=11 // pred_check
          %p404 = pneg %p124
        $region18: #{tpu_custom_call.1} parent=11 // pred_check_branch
          %406 = sbr.rel (%p404) target = $region20
        $region19: #{tpu_custom_call.1} parent=11 // pred_region
          _
        $region20: #{tpu_custom_call.1} parent=11 // pred_fallthru
          _
        // Predicated region
        $region21: #{tpu_custom_call.1} parent=11 // pred_check
          %p407 = pneg %p145
        $region22: #{tpu_custom_call.1} parent=11 // pred_check_branch
          %409 = sbr.rel (%p407) target = $region24
        $region23: #{tpu_custom_call.1} parent=11 // pred_region
          %s411 = ssub.s32 256, 256
          %412 = vsyncadd [#allocation3], %s411
          %s413 = sshll.u32 [#allocation2], 4
          %s414 = int_to_ptr.vmem [resolvable:$true] %s413
          %419 = dma.hbm_to_vmem [thread:$0]  %s4, 256, %s414, [#allocation3], 64, 64, 4
        $region24: #{tpu_custom_call.1} parent=11 // pred_fallthru
          _
        // Predicated region
        $region25: #{tpu_custom_call.1} parent=11 // pred_check
          %p420 = pneg %p166
        $region26: #{tpu_custom_call.1} parent=11 // pred_check_branch
          %422 = sbr.rel (%p420) target = $region28
        $region27: #{tpu_custom_call.1} parent=11 // pred_region
          _
        $region28: #{tpu_custom_call.1} parent=11 // pred_fallthru
          _
        // Predicated region
        $region29: #{tpu_custom_call.1} parent=11 // pred_check
          %p423 = pneg %p187
        $region30: #{tpu_custom_call.1} parent=11 // pred_check_branch
          %425 = sbr.rel (%p423) target = $region32
        $region31: #{tpu_custom_call.1} parent=11 // pred_region
          _
        $region32: #{tpu_custom_call.1} parent=11 // pred_fallthru
          _
        // Predicated region
        $region33: #{tpu_custom_call.1} parent=11 // pred_check
          %p426 = pneg %p208
        $region34: #{tpu_custom_call.1} parent=11 // pred_check_branch
          %428 = sbr.rel (%p426) target = $region36
        $region35: #{tpu_custom_call.1} parent=11 // pred_region
          _
        $region36: #{tpu_custom_call.1} parent=11 // pred_fallthru
          _
        // Predicated region
        $region37: #{tpu_custom_call.1} parent=11 // pred_check
          %p429 = pneg %p229
        $region38: #{tpu_custom_call.1} parent=11 // pred_check_branch
          %431 = sbr.rel (%p429) target = $region40
        $region39: #{tpu_custom_call.1} parent=11 // pred_region
          %s433 = ssub.s32 256, 256
          %434 = vsyncadd [#allocation6], %s433
          %s435 = sshll.u32 [#allocation5], 4
          %s436 = int_to_ptr.vmem [resolvable:$true] %s435
          %441 = dma.hbm_to_vmem [thread:$0]  %s8, 256, %s436, [#allocation6], 64, 64, 4
        $region40: #{tpu_custom_call.1} parent=11 // pred_fallthru
          _
        // Predicated region
        $region41: #{tpu_custom_call.1} parent=11 // pred_check
          %p442 = pneg %p250
        $region42: #{tpu_custom_call.1} parent=11 // pred_check_branch
          %444 = sbr.rel (%p442) target = $region44
        $region43: #{tpu_custom_call.1} parent=11 // pred_region
          _
        $region44: #{tpu_custom_call.1} parent=11 // pred_fallthru
          _
        // Predicated region
        $region45: #{tpu_custom_call.1} parent=11 // pred_check
          %p445 = pneg %p271
        $region46: #{tpu_custom_call.1} parent=11 // pred_check_branch
          %447 = sbr.rel (%p445) target = $region48
        $region47: #{tpu_custom_call.1} parent=11 // pred_region
          _
        $region48: #{tpu_custom_call.1} parent=11 // pred_fallthru
          _
        // Predicated region
        $region49: #{tpu_custom_call.1} parent=11 // pred_check
          %p448 = pneg %p292
        $region50: #{tpu_custom_call.1} parent=11 // pred_check_branch
          %450 = sbr.rel (%p448) target = $region52
        $region51: #{tpu_custom_call.1} parent=11 // pred_region
          _
        $region52: #{tpu_custom_call.1} parent=11 // pred_fallthru
          _
        // Predicated region
        $region53: #{tpu_custom_call.1} parent=11 // pred_check
          %p451 = pneg %p313
        $region54: #{tpu_custom_call.1} parent=11 // pred_check_branch
          %453 = sbr.rel (%p451) target = $region56
        $region55: #{tpu_custom_call.1} parent=11 // pred_region
          _
        $region56: #{tpu_custom_call.1} parent=11 // pred_fallthru
          _
        // Predicated region
        $region57: #{tpu_custom_call.1} parent=11 // pred_check
          %p454 = pneg %p334
        $region58: #{tpu_custom_call.1} parent=11 // pred_check_branch
          %456 = sbr.rel (%p454) target = $region60
        $region59: #{tpu_custom_call.1} parent=11 // pred_region
          _
        $region60: #{tpu_custom_call.1} parent=11 // pred_fallthru
          _
      $region12: #{tpu_custom_call.1} parent=5 // pred_fallthru
        _
      %p457 = scmp.lt.s32.totalorder %s30, 2
      // Predicated region
      $region61: #{tpu_custom_call.1} parent=5 // pred_check
        %p458 = pneg %p457
      $region62: #{tpu_custom_call.1} parent=5 // pred_check_branch
        %460 = sbr.rel (%p458) target = $region64
      $region63: #{tpu_custom_call.1} parent=5 // pred_region
        // Predicated region
        $region65: #{tpu_custom_call.1} parent=63 // pred_check
          %p461 = pneg %p50
        $region66: #{tpu_custom_call.1} parent=63 // pred_check_branch
          %463 = sbr.rel (%p461) target = $region68
        $region67: #{tpu_custom_call.1} parent=63 // pred_region
          %p464 = scmp.lt.s32.totalorder %s30, 1
          %s465 = scalar_select %p464, %s30, 1
          %s466 = smul.addr %s465, 8
          %s467 = scalar_lea.vmem %s0, %s466
        $region68: #{tpu_custom_call.1} parent=63 // pred_fallthru
          _
        // Predicated region
        $region69: #{tpu_custom_call.1} parent=63 // pred_check
          %p468 = pneg %p76
        $region70: #{tpu_custom_call.1} parent=63 // pred_check_branch
          %470 = sbr.rel (%p468) target = $region72
        $region71: #{tpu_custom_call.1} parent=63 // pred_region
          %p471 = scmp.lt.s32.totalorder %s30, 1
          %s472 = scalar_select %p471, %s30, 1
          %s473 = smul.addr %s472, 8
          %s474 = scalar_lea.vmem %s1, %s473
        $region72: #{tpu_custom_call.1} parent=63 // pred_fallthru
          _
      $region64: #{tpu_custom_call.1} parent=5 // pred_fallthru
        _
      %p475 = scmp.le.s32.totalorder 1, %s30
      %p476 = scmp.lt.s32.totalorder %s30, 3
      %p477 = pnand %p475, %p476
      %p478 = pneg %p477
      // Predicated region
      $region73: #{tpu_custom_call.1} parent=5 // pred_check
        _
      $region74: #{tpu_custom_call.1} parent=5 // pred_check_branch
        %480 = sbr.rel (%p477) target = $region76
      $region75: #{tpu_custom_call.1} parent=5 // pred_region
        %s481 = ssub.s32 %s30, 1
        // Predicated region
        $region77: #{tpu_custom_call.1} parent=75 // pred_check
          %p482 = pneg %p145
        $region78: #{tpu_custom_call.1} parent=75 // pred_check_branch
          %484 = sbr.rel (%p482) target = $region80
        $region79: #{tpu_custom_call.1} parent=75 // pred_region
          %485 = dma.done [#allocation3], 256
        $region80: #{tpu_custom_call.1} parent=75 // pred_fallthru
          _
        // Predicated region
        $region81: #{tpu_custom_call.1} parent=75 // pred_check
          %p486 = pneg %p229
        $region82: #{tpu_custom_call.1} parent=75 // pred_check_branch
          %488 = sbr.rel (%p486) target = $region84
        $region83: #{tpu_custom_call.1} parent=75 // pred_region
          %489 = dma.done [#allocation6], 256
        $region84: #{tpu_custom_call.1} parent=75 // pred_fallthru
          _
        %p490 = scmp.lt.s32.totalorder %s35, 1
        %s491 = scalar_select %p490, %s35, 1
        %s492 = smul.addr %s491, 8
        %s493 = scalar_lea.vmem %s0, %s492
        %p494 = pneg %p56
        %p495 = pneg %p53
        %p496 = scmp.lt.s32.totalorder %s35, 1
        %s497 = scalar_select %p496, %s35, 1
        %s498 = smul.addr %s497, 8
        %s499 = scalar_lea.vmem %s1, %s498
        %p500 = pneg %p82
        %p501 = pneg %p79
        %p502 = pneg %p103
        %p503 = pneg %p100
        %p504 = pneg %p124
        %p505 = pneg %p121
        %p506 = pneg %p145
        %p507 = pneg %p142
        %p508 = pneg %p166
        %p509 = pneg %p163
        %p510 = pneg %p187
        %p511 = pneg %p184
        %p512 = pneg %p208
        %p513 = pneg %p205
        %p514 = pneg %p229
        %p515 = pneg %p226
        %p516 = pneg %p250
        %p517 = pneg %p247
        %p518 = pneg %p271
        %p519 = pneg %p268
        %p520 = pneg %p292
        %p521 = pneg %p289
        %p522 = pneg %p313
        %p523 = pneg %p310
        %p524 = pneg %p334
        %p525 = pneg %p331
        %p526 = pneg %p360
        %p527 = pneg %p357
        %s528 = sand.u32 %s347, 1
        %s529 = scalar_lea.sflag [#allocation4], %s528
        %s530 = sand.u32 %s347, 1
        %s531 = smul.addr %s530, 8
        %s532 = scalar_lea.vmem [#allocation7], %s531
        %p533 = pneg %p386
        %p534 = pneg %p383
        %s535 = sand.u32 %s373, 1
        %s536 = scalar_lea.sflag [#allocation9], %s535
        %s537 = sand.u32 %s373, 1
        %s538 = smul.addr %s537, 32
        %s539 = scalar_lea.vmem [#allocation8], %s538
        %p540 = scmp.lt.s32.totalorder %s35, 1
        %s541 = scalar_select %p540, %s35, 1
        %s542 = smul.addr %s541, 8
        %s543 = scalar_lea.vmem %s0, %s542
        %p544 = scmp.lt.s32.totalorder %s35, 1
        %s545 = scalar_select %p544, %s35, 1
        %s546 = smul.addr %s545, 8
        %s547 = scalar_lea.vmem %s1, %s546
        %v549 = vld [vmem:[%s547] sm:$0xff]
        %v550 = vpack.c.bf16 %v549, %v549
        %v551 = vld [vmem:[%s2] sm:$0xf]
        %v552 = vld [vmem:[%s2 + $0x4] sm:$0xf]
        %v553 = vld [vmem:[%s2 + $0x8] sm:$0xf]
        %v554 = vld [vmem:[%s2 + $0xc] sm:$0xf]
        %v555 = vld [vmem:[%s3] sm:$0x1]
        %v557 = vlaneseq
        %v558 = vshrl.u32 %v557, 7
        %v559 = vsub.s32 0, %v558
        %v560 = vrot.slane %v555, %v559
        %v566 = vunpack.c.l.b16 %v551
        %v567 = vunpack.c.l.b16 %v552
        %v568 = vunpack.c.l.b16 %v553
        %v569 = vunpack.c.l.b16 %v554
        %v570 = vpack.c.b16 %v567, %v566
        %v571 = vpack.c.b16 %v569, %v568
        %vm574 = vcmask 261120
        %v576 = vsel %vm574, %v550, 0
        %578 = vmatprep.subr.bf16.mxu0 0
        %579 = vmatpush1.bf16.msra.mxu0 %v570
        %580 = vmatprep.subr.bf16.mxu0 0
        %581 = vmatpush1.bf16.msra.mxu0 %v571
        %582 = vmatprep.subr.bf16.mxu0 0
        %583 = vmatpush1.bf16.msra.mxu0 0
        %584 = vmatprep.subr.bf16.mxu0 0
        %585 = vmatpush1.bf16.msra.mxu0 0
        %586 = vmatprep.subr.bf16.mxu0 0
        %587 = vmatpush1.bf16.msra.mxu0 0
        %588 = vmatprep.subr.bf16.mxu0 0
        %589 = vmatpush1.bf16.msra.mxu0 0
        %590 = vmatprep.subr.bf16.mxu0 0
        %591 = vmatpush1.bf16.msra.mxu0 0
        %592 = vmatprep.subr.bf16.mxu0 0
        %593 = vmatpush1.bf16.msra.mxu0 0
        %594 = vmatprep.subr.bf16.mxu0 0
        %595 = vmatpush1.bf16.msra.mxu0 0
        %596 = vmatprep.subr.bf16.mxu0 0
        %597 = vmatpush1.bf16.msra.mxu0 0
        %598 = vmatprep.subr.bf16.mxu0 0
        %599 = vmatpush1.bf16.msra.mxu0 0
        %600 = vmatprep.subr.bf16.mxu0 0
        %601 = vmatpush1.bf16.msra.mxu0 0
        %602 = vmatprep.subr.bf16.mxu0 0
        %603 = vmatpush1.bf16.msra.mxu0 0
        %604 = vmatprep.subr.bf16.mxu0 0
        %605 = vmatpush1.bf16.msra.mxu0 0
        %606 = vmatprep.subr.bf16.mxu0 0
        %607 = vmatpush1.bf16.msra.mxu0 0
        %608 = vmatprep.subr.bf16.mxu0 0
        %609 = vmatpush1.bf16.msra.mxu0 0
        %610 = vmatprep.mubr.bf16.mxu0 0
        %611 = vmatmul.mubr.bf16.gmra.mrb[0].mxu0 %v576
        %v612 = vpop.f32.mrb[0].mxu0
        %v613 = vadd.f32 %v560, %v612
        %v614 = vpop.f32.mrb[0].mxu0
        %v615 = vpop.f32.mrb[0].mxu0
        %v616 = vpop.f32.mrb[0].mxu0
        %617 = vdwg.mxu0
        %v618 = vpack.c.bf16 %v613, %v613
        %620 = vrot.lane.b32.xlu0 %v618, 120
        %v621 = vpop.permute.xlu0 %620
        %622 = vrot.lane.b32.xlu0 %v618, 112
        %v623 = vpop.permute.xlu0 %622
        %624 = vrot.lane.b32.xlu0 %v618, 104
        %v625 = vpop.permute.xlu0 %624
        %626 = vrot.lane.b32.xlu0 %v618, 96
        %v627 = vpop.permute.xlu0 %626
        %vm628 = vcmask 64512
        %v630 = vsel %vm628, %v618, 0
        %v633 = vsel %vm628, %v627, 0
        %635 = vmatprep.subr.bf16.mxu0 0
        %636 = vmatpush1.bf16.xpose.msra.mxu0 %v633
        %637 = vmatprep.subr.bf16.mxu0 0
        %638 = vmatpush1.bf16.xpose.msra.mxu0 0
        %639 = vmatprep.subr.bf16.mxu0 0
        %640 = vmatpush1.bf16.xpose.msra.mxu0 0
        %641 = vmatprep.subr.bf16.mxu0 0
        %642 = vmatpush1.bf16.xpose.msra.mxu0 0
        %643 = vmatprep.subr.bf16.mxu0 0
        %644 = vmatpush1.bf16.xpose.msra.mxu0 0
        %645 = vmatprep.subr.bf16.mxu0 0
        %646 = vmatpush1.bf16.xpose.msra.mxu0 0
        %647 = vmatprep.subr.bf16.mxu0 0
        %648 = vmatpush1.bf16.xpose.msra.mxu0 0
        %649 = vmatprep.subr.bf16.mxu0 0
        %650 = vmatpush1.bf16.xpose.msra.mxu0 0
        %651 = vmatprep.subr.bf16.mxu0 0
        %652 = vmatpush1.bf16.xpose.msra.mxu0 0
        %653 = vmatprep.subr.bf16.mxu0 0
        %654 = vmatpush1.bf16.xpose.msra.mxu0 0
        %655 = vmatprep.subr.bf16.mxu0 0
        %656 = vmatpush1.bf16.xpose.msra.mxu0 0
        %657 = vmatprep.subr.bf16.mxu0 0
        %658 = vmatpush1.bf16.xpose.msra.mxu0 0
        %659 = vmatprep.subr.bf16.mxu0 0
        %660 = vmatpush1.bf16.xpose.msra.mxu0 0
        %661 = vmatprep.subr.bf16.mxu0 0
        %662 = vmatpush1.bf16.xpose.msra.mxu0 0
        %663 = vmatprep.subr.bf16.mxu0 0
        %664 = vmatpush1.bf16.xpose.msra.mxu0 0
        %665 = vmatprep.subr.bf16.mxu0 0
        %666 = vmatpush1.bf16.xpose.msra.mxu0 0
        %667 = vmatprep.mubr.bf16.mxu0 0
        %668 = vmatmul.mubr.bf16.gmra.mrb[0].mxu0 %v630
        %v669 = vpop.f32.mrb[0].mxu0
        %v670 = vadd.f32 0.0, %v669
        %v671 = vpop.f32.mrb[0].mxu0
        %v672 = vpop.f32.mrb[0].mxu0
        %v673 = vpop.f32.mrb[0].mxu0
        %674 = vdwg.mxu0
        %675 = vrot.lane.b32.xlu0 %v621, 96
        %v676 = vpop.permute.xlu0 %675
        %v678 = vsel %vm628, %v621, 0
        %v681 = vsel %vm628, %v676, 0
        %683 = vmatprep.subr.bf16.mxu0 0
        %684 = vmatpush1.bf16.xpose.msra.mxu0 %v681
        %685 = vmatprep.subr.bf16.mxu0 0
        %686 = vmatpush1.bf16.xpose.msra.mxu0 0
        %687 = vmatprep.subr.bf16.mxu0 0
        %688 = vmatpush1.bf16.xpose.msra.mxu0 0
        %689 = vmatprep.subr.bf16.mxu0 0
        %690 = vmatpush1.bf16.xpose.msra.mxu0 0
        %691 = vmatprep.subr.bf16.mxu0 0
        %692 = vmatpush1.bf16.xpose.msra.mxu0 0
        %693 = vmatprep.subr.bf16.mxu0 0
        %694 = vmatpush1.bf16.xpose.msra.mxu0 0
        %695 = vmatprep.subr.bf16.mxu0 0
        %696 = vmatpush1.bf16.xpose.msra.mxu0 0
        %697 = vmatprep.subr.bf16.mxu0 0
        %698 = vmatpush1.bf16.xpose.msra.mxu0 0
        %699 = vmatprep.subr.bf16.mxu0 0
        %700 = vmatpush1.bf16.xpose.msra.mxu0 0
        %701 = vmatprep.subr.bf16.mxu0 0
        %702 = vmatpush1.bf16.xpose.msra.mxu0 0
        %703 = vmatprep.subr.bf16.mxu0 0
        %704 = vmatpush1.bf16.xpose.msra.mxu0 0
        %705 = vmatprep.subr.bf16.mxu0 0
        %706 = vmatpush1.bf16.xpose.msra.mxu0 0
        %707 = vmatprep.subr.bf16.mxu0 0
        %708 = vmatpush1.bf16.xpose.msra.mxu0 0
        %709 = vmatprep.subr.bf16.mxu0 0
        %710 = vmatpush1.bf16.xpose.msra.mxu0 0
        %711 = vmatprep.subr.bf16.mxu0 0
        %712 = vmatpush1.bf16.xpose.msra.mxu0 0
        %713 = vmatprep.subr.bf16.mxu0 0
        %714 = vmatpush1.bf16.xpose.msra.mxu0 0
        %715 = vmatprep.mubr.bf16.mxu0 0
        %716 = vmatmul.mubr.bf16.gmra.mrb[0].mxu0 %v678
        %v717 = vpop.f32.mrb[0].mxu0
        %v718 = vadd.f32 0.0, %v717
        %v719 = vpop.f32.mrb[0].mxu0
        %v720 = vpop.f32.mrb[0].mxu0
        %v721 = vpop.f32.mrb[0].mxu0
        %722 = vdwg.mxu0
        %723 = vrot.lane.b32.xlu0 %v623, 96
        %v724 = vpop.permute.xlu0 %723
        %v726 = vsel %vm628, %v623, 0
        %v729 = vsel %vm628, %v724, 0
        %731 = vmatprep.subr.bf16.mxu0 0
        %732 = vmatpush1.bf16.xpose.msra.mxu0 %v729
        %733 = vmatprep.subr.bf16.mxu0 0
        %734 = vmatpush1.bf16.xpose.msra.mxu0 0
        %735 = vmatprep.subr.bf16.mxu0 0
        %736 = vmatpush1.bf16.xpose.msra.mxu0 0
        %737 = vmatprep.subr.bf16.mxu0 0
        %738 = vmatpush1.bf16.xpose.msra.mxu0 0
        %739 = vmatprep.subr.bf16.mxu0 0
        %740 = vmatpush1.bf16.xpose.msra.mxu0 0
        %741 = vmatprep.subr.bf16.mxu0 0
        %742 = vmatpush1.bf16.xpose.msra.mxu0 0
        %743 = vmatprep.subr.bf16.mxu0 0
        %744 = vmatpush1.bf16.xpose.msra.mxu0 0
        %745 = vmatprep.subr.bf16.mxu0 0
        %746 = vmatpush1.bf16.xpose.msra.mxu0 0
        %747 = vmatprep.subr.bf16.mxu0 0
        %748 = vmatpush1.bf16.xpose.msra.mxu0 0
        %749 = vmatprep.subr.bf16.mxu0 0
        %750 = vmatpush1.bf16.xpose.msra.mxu0 0
        %751 = vmatprep.subr.bf16.mxu0 0
        %752 = vmatpush1.bf16.xpose.msra.mxu0 0
        %753 = vmatprep.subr.bf16.mxu0 0
        %754 = vmatpush1.bf16.xpose.msra.mxu0 0
        %755 = vmatprep.subr.bf16.mxu0 0
        %756 = vmatpush1.bf16.xpose.msra.mxu0 0
        %757 = vmatprep.subr.bf16.mxu0 0
        %758 = vmatpush1.bf16.xpose.msra.mxu0 0
        %759 = vmatprep.subr.bf16.mxu0 0
        %760 = vmatpush1.bf16.xpose.msra.mxu0 0
        %761 = vmatprep.subr.bf16.mxu0 0
        %762 = vmatpush1.bf16.xpose.msra.mxu0 0
        %763 = vmatprep.mubr.bf16.mxu0 0
        %764 = vmatmul.mubr.bf16.gmra.mrb[0].mxu0 %v726
        %v765 = vpop.f32.mrb[0].mxu0
        %v766 = vadd.f32 0.0, %v765
        %v767 = vpop.f32.mrb[0].mxu0
        %v768 = vpop.f32.mrb[0].mxu0
        %v769 = vpop.f32.mrb[0].mxu0
        %770 = vdwg.mxu0
        %771 = vrot.lane.b32.xlu0 %v625, 96
        %v772 = vpop.permute.xlu0 %771
        %v774 = vsel %vm628, %v625, 0
        %v777 = vsel %vm628, %v772, 0
        %779 = vmatprep.subr.bf16.mxu0 0
        %780 = vmatpush1.bf16.xpose.msra.mxu0 %v777
        %781 = vmatprep.subr.bf16.mxu0 0
        %782 = vmatpush1.bf16.xpose.msra.mxu0 0
        %783 = vmatprep.subr.bf16.mxu0 0
        %784 = vmatpush1.bf16.xpose.msra.mxu0 0
        %785 = vmatprep.subr.bf16.mxu0 0
        %786 = vmatpush1.bf16.xpose.msra.mxu0 0
        %787 = vmatprep.subr.bf16.mxu0 0
        %788 = vmatpush1.bf16.xpose.msra.mxu0 0
        %789 = vmatprep.subr.bf16.mxu0 0
        %790 = vmatpush1.bf16.xpose.msra.mxu0 0
        %791 = vmatprep.subr.bf16.mxu0 0
        %792 = vmatpush1.bf16.xpose.msra.mxu0 0
        %793 = vmatprep.subr.bf16.mxu0 0
        %794 = vmatpush1.bf16.xpose.msra.mxu0 0
        %795 = vmatprep.subr.bf16.mxu0 0
        %796 = vmatpush1.bf16.xpose.msra.mxu0 0
        %797 = vmatprep.subr.bf16.mxu0 0
        %798 = vmatpush1.bf16.xpose.msra.mxu0 0
        %799 = vmatprep.subr.bf16.mxu0 0
        %800 = vmatpush1.bf16.xpose.msra.mxu0 0
        %801 = vmatprep.subr.bf16.mxu0 0
        %802 = vmatpush1.bf16.xpose.msra.mxu0 0
        %803 = vmatprep.subr.bf16.mxu0 0
        %804 = vmatpush1.bf16.xpose.msra.mxu0 0
        %805 = vmatprep.subr.bf16.mxu0 0
        %806 = vmatpush1.bf16.xpose.msra.mxu0 0
        %807 = vmatprep.subr.bf16.mxu0 0
        %808 = vmatpush1.bf16.xpose.msra.mxu0 0
        %809 = vmatprep.subr.bf16.mxu0 0
        %810 = vmatpush1.bf16.xpose.msra.mxu0 0
        %811 = vmatprep.mubr.bf16.mxu0 0
        %812 = vmatmul.mubr.bf16.gmra.mrb[0].mxu0 %v774
        %v813 = vpop.f32.mrb[0].mxu0
        %v814 = vadd.f32 0.0, %v813
        %v815 = vpop.f32.mrb[0].mxu0
        %v816 = vpop.f32.mrb[0].mxu0
        %v817 = vpop.f32.mrb[0].mxu0
        %818 = vdwg.mxu0
        %v819 = vld [vmem:[%s543] sm:$0xff]
        %v820 = vadd.f32 %v670, %v819
        %v821 = vadd.f32 %v718, %v819
        %v822 = vadd.f32 %v766, %v819
        %v823 = vadd.f32 %v814, %v819
        %v824 = vsel %vm628, %v820, -inf
        %825 = vmax.xlane.f32.xlu0 %v824
        %v826 = vpop.xlane.xlu0 %825
        %v827 = vsel %vm628, %v821, -inf
        %828 = vmax.xlane.f32.xlu0 %v827
        %v829 = vpop.xlane.xlu0 %828
        %v830 = vsel %vm628, %v822, -inf
        %831 = vmax.xlane.f32.xlu0 %v830
        %v832 = vpop.xlane.xlu0 %831
        %v833 = vsel %vm628, %v823, -inf
        %834 = vmax.xlane.f32.xlu0 %v833
        %v835 = vpop.xlane.xlu0 %834
        %v836 = vsub.f32 %v820, %v826
        %v837 = vsub.f32 %v821, %v829
        %v838 = vsub.f32 %v822, %v832
        %v839 = vsub.f32 %v823, %v835
        %v840 = vmul.f32 %v836, 1.442695
        %v841 = vpow.pop %v840
        %v842 = vmul.f32 %v837, 1.442695
        %v843 = vpow.pop %v842
        %v844 = vmul.f32 %v838, 1.442695
        %v845 = vpow.pop %v844
        %v846 = vmul.f32 %v839, 1.442695
        %v847 = vpow.pop %v846
        %v848 = vsel %vm628, %v841, 0.0
        %849 = vadd.xlane.f32.xlu0 %v848
        %v850 = vpop.xlane.xlu0 %849
        %v851 = vsel %vm628, %v843, 0.0
        %852 = vadd.xlane.f32.xlu0 %v851
        %v853 = vpop.xlane.xlu0 %852
        %v854 = vsel %vm628, %v845, 0.0
        %855 = vadd.xlane.f32.xlu0 %v854
        %v856 = vpop.xlane.xlu0 %855
        %v857 = vsel %vm628, %v847, 0.0
        %858 = vadd.xlane.f32.xlu0 %v857
        %v859 = vpop.xlane.xlu0 %858
        %v860 = vrcp.pop %v850
        %v861 = vrcp.pop %v853
        %v862 = vrcp.pop %v856
        %v863 = vrcp.pop %v859
        %v864 = vmul.f32 %v841, %v860
        %v865 = vmul.f32 %v843, %v861
        %v866 = vmul.f32 %v845, %v862
        %v867 = vmul.f32 %v847, %v863
        %868 = vst.msk [vmem:[%s539] sm:$0xff] %vm628, %v864
        %869 = vst.msk [vmem:[%s539 + $0x8] sm:$0xff] %vm628, %v865
        %870 = vst.msk [vmem:[%s539 + $0x10] sm:$0xff] %vm628, %v866
        %871 = vst.msk [vmem:[%s539 + $0x18] sm:$0xff] %vm628, %v867
        %v872 = vpack.c.bf16 %v864, %v864
        %v873 = vpack.c.bf16 %v865, %v865
        %v874 = vpack.c.bf16 %v866, %v866
        %v875 = vpack.c.bf16 %v867, %v867
        %876 = vrot.lane.b32.xlu0 %v618, 64
        %v877 = vpop.permute.xlu0 %876
        %v879 = vsel %vm628, %v872, 0
        %vm881 = vcmask 1043456
        %v883 = vsel %vm881, %v877, 0
        %885 = vmatprep.subr.bf16.mxu0 0
        %886 = vmatpush1.bf16.msra.mxu0 %v883
        %887 = vmatprep.subr.bf16.mxu0 0
        %888 = vmatpush1.bf16.msra.mxu0 0
        %889 = vmatprep.subr.bf16.mxu0 0
        %890 = vmatpush1.bf16.msra.mxu0 0
        %891 = vmatprep.subr.bf16.mxu0 0
        %892 = vmatpush1.bf16.msra.mxu0 0
        %893 = vmatprep.subr.bf16.mxu0 0
        %894 = vmatpush1.bf16.msra.mxu0 0
        %895 = vmatprep.subr.bf16.mxu0 0
        %896 = vmatpush1.bf16.msra.mxu0 0
        %897 = vmatprep.subr.bf16.mxu0 0
        %898 = vmatpush1.bf16.msra.mxu0 0
        %899 = vmatprep.subr.bf16.mxu0 0
        %900 = vmatpush1.bf16.msra.mxu0 0
        %901 = vmatprep.subr.bf16.mxu0 0
        %902 = vmatpush1.bf16.msra.mxu0 0
        %903 = vmatprep.subr.bf16.mxu0 0
        %904 = vmatpush1.bf16.msra.mxu0 0
        %905 = vmatprep.subr.bf16.mxu0 0
        %906 = vmatpush1.bf16.msra.mxu0 0
        %907 = vmatprep.subr.bf16.mxu0 0
        %908 = vmatpush1.bf16.msra.mxu0 0
        %909 = vmatprep.subr.bf16.mxu0 0
        %910 = vmatpush1.bf16.msra.mxu0 0
        %911 = vmatprep.subr.bf16.mxu0 0
        %912 = vmatpush1.bf16.msra.mxu0 0
        %913 = vmatprep.subr.bf16.mxu0 0
        %914 = vmatpush1.bf16.msra.mxu0 0
        %915 = vmatprep.subr.bf16.mxu0 0
        %916 = vmatpush1.bf16.msra.mxu0 0
        %917 = vmatprep.mubr.bf16.mxu0 0
        %918 = vmatmul.mubr.bf16.gmra.mrb[0].mxu0 %v879
        %v919 = vpop.f32.mrb[0].mxu0
        %v920 = vadd.f32 0.0, %v919
        %v921 = vpop.f32.mrb[0].mxu0
        %v922 = vpop.f32.mrb[0].mxu0
        %v923 = vpop.f32.mrb[0].mxu0
        %924 = vdwg.mxu0
        %925 = vrot.lane.b32.xlu0 %v621, 64
        %v926 = vpop.permute.xlu0 %925
        %v928 = vsel %vm628, %v873, 0
        %v931 = vsel %vm881, %v926, 0
        %933 = vmatprep.subr.bf16.mxu0 0
        %934 = vmatpush1.bf16.msra.mxu0 %v931
        %935 = vmatprep.subr.bf16.mxu0 0
        %936 = vmatpush1.bf16.msra.mxu0 0
        %937 = vmatprep.subr.bf16.mxu0 0
        %938 = vmatpush1.bf16.msra.mxu0 0
        %939 = vmatprep.subr.bf16.mxu0 0
        %940 = vmatpush1.bf16.msra.mxu0 0
        %941 = vmatprep.subr.bf16.mxu0 0
        %942 = vmatpush1.bf16.msra.mxu0 0
        %943 = vmatprep.subr.bf16.mxu0 0
        %944 = vmatpush1.bf16.msra.mxu0 0
        %945 = vmatprep.subr.bf16.mxu0 0
        %946 = vmatpush1.bf16.msra.mxu0 0
        %947 = vmatprep.subr.bf16.mxu0 0
        %948 = vmatpush1.bf16.msra.mxu0 0
        %949 = vmatprep.subr.bf16.mxu0 0
        %950 = vmatpush1.bf16.msra.mxu0 0
        %951 = vmatprep.subr.bf16.mxu0 0
        %952 = vmatpush1.bf16.msra.mxu0 0
        %953 = vmatprep.subr.bf16.mxu0 0
        %954 = vmatpush1.bf16.msra.mxu0 0
        %955 = vmatprep.subr.bf16.mxu0 0
        %956 = vmatpush1.bf16.msra.mxu0 0
        %957 = vmatprep.subr.bf16.mxu0 0
        %958 = vmatpush1.bf16.msra.mxu0 0
        %959 = vmatprep.subr.bf16.mxu0 0
        %960 = vmatpush1.bf16.msra.mxu0 0
        %961 = vmatprep.subr.bf16.mxu0 0
        %962 = vmatpush1.bf16.msra.mxu0 0
        %963 = vmatprep.subr.bf16.mxu0 0
        %964 = vmatpush1.bf16.msra.mxu0 0
        %965 = vmatprep.mubr.bf16.mxu0 0
        %966 = vmatmul.mubr.bf16.gmra.mrb[0].mxu0 %v928
        %v967 = vpop.f32.mrb[0].mxu0
        %v968 = vadd.f32 0.0, %v967
        %v969 = vpop.f32.mrb[0].mxu0
        %v970 = vpop.f32.mrb[0].mxu0
        %v971 = vpop.f32.mrb[0].mxu0
        %972 = vdwg.mxu0
        %973 = vrot.lane.b32.xlu0 %v623, 64
        %v974 = vpop.permute.xlu0 %973
        %v976 = vsel %vm628, %v874, 0
        %v979 = vsel %vm881, %v974, 0
        %981 = vmatprep.subr.bf16.mxu0 0
        %982 = vmatpush1.bf16.msra.mxu0 %v979
        %983 = vmatprep.subr.bf16.mxu0 0
        %984 = vmatpush1.bf16.msra.mxu0 0
        %985 = vmatprep.subr.bf16.mxu0 0
        %986 = vmatpush1.bf16.msra.mxu0 0
        %987 = vmatprep.subr.bf16.mxu0 0
        %988 = vmatpush1.bf16.msra.mxu0 0
        %989 = vmatprep.subr.bf16.mxu0 0
        %990 = vmatpush1.bf16.msra.mxu0 0
        %991 = vmatprep.subr.bf16.mxu0 0
        %992 = vmatpush1.bf16.msra.mxu0 0
        %993 = vmatprep.subr.bf16.mxu0 0
        %994 = vmatpush1.bf16.msra.mxu0 0
        %995 = vmatprep.subr.bf16.mxu0 0
        %996 = vmatpush1.bf16.msra.mxu0 0
        %997 = vmatprep.subr.bf16.mxu0 0
        %998 = vmatpush1.bf16.msra.mxu0 0
        %999 = vmatprep.subr.bf16.mxu0 0
        %1000 = vmatpush1.bf16.msra.mxu0 0
        %1001 = vmatprep.subr.bf16.mxu0 0
        %1002 = vmatpush1.bf16.msra.mxu0 0
        %1003 = vmatprep.subr.bf16.mxu0 0
        %1004 = vmatpush1.bf16.msra.mxu0 0
        %1005 = vmatprep.subr.bf16.mxu0 0
        %1006 = vmatpush1.bf16.msra.mxu0 0
        %1007 = vmatprep.subr.bf16.mxu0 0
        %1008 = vmatpush1.bf16.msra.mxu0 0
        %1009 = vmatprep.subr.bf16.mxu0 0
        %1010 = vmatpush1.bf16.msra.mxu0 0
        %1011 = vmatprep.subr.bf16.mxu0 0
        %1012 = vmatpush1.bf16.msra.mxu0 0
        %1013 = vmatprep.mubr.bf16.mxu0 0
        %1014 = vmatmul.mubr.bf16.gmra.mrb[0].mxu0 %v976
        %v1015 = vpop.f32.mrb[0].mxu0
        %v1016 = vadd.f32 0.0, %v1015
        %v1017 = vpop.f32.mrb[0].mxu0
        %v1018 = vpop.f32.mrb[0].mxu0
        %v1019 = vpop.f32.mrb[0].mxu0
        %1020 = vdwg.mxu0
        %1021 = vrot.lane.b32.xlu0 %v625, 64
        %v1022 = vpop.permute.xlu0 %1021
        %v1024 = vsel %vm628, %v875, 0
        %v1027 = vsel %vm881, %v1022, 0
        %1029 = vmatprep.subr.bf16.mxu0 0
        %1030 = vmatpush1.bf16.msra.mxu0 %v1027
        %1031 = vmatprep.subr.bf16.mxu0 0
        %1032 = vmatpush1.bf16.msra.mxu0 0
        %1033 = vmatprep.subr.bf16.mxu0 0
        %1034 = vmatpush1.bf16.msra.mxu0 0
        %1035 = vmatprep.subr.bf16.mxu0 0
        %1036 = vmatpush1.bf16.msra.mxu0 0
        %1037 = vmatprep.subr.bf16.mxu0 0
        %1038 = vmatpush1.bf16.msra.mxu0 0
        %1039 = vmatprep.subr.bf16.mxu0 0
        %1040 = vmatpush1.bf16.msra.mxu0 0
        %1041 = vmatprep.subr.bf16.mxu0 0
        %1042 = vmatpush1.bf16.msra.mxu0 0
        %1043 = vmatprep.subr.bf16.mxu0 0
        %1044 = vmatpush1.bf16.msra.mxu0 0
        %1045 = vmatprep.subr.bf16.mxu0 0
        %1046 = vmatpush1.bf16.msra.mxu0 0
        %1047 = vmatprep.subr.bf16.mxu0 0
        %1048 = vmatpush1.bf16.msra.mxu0 0
        %1049 = vmatprep.subr.bf16.mxu0 0
        %1050 = vmatpush1.bf16.msra.mxu0 0
        %1051 = vmatprep.subr.bf16.mxu0 0
        %1052 = vmatpush1.bf16.msra.mxu0 0
        %1053 = vmatprep.subr.bf16.mxu0 0
        %1054 = vmatpush1.bf16.msra.mxu0 0
        %1055 = vmatprep.subr.bf16.mxu0 0
        %1056 = vmatpush1.bf16.msra.mxu0 0
        %1057 = vmatprep.subr.bf16.mxu0 0
        %1058 = vmatpush1.bf16.msra.mxu0 0
        %1059 = vmatprep.subr.bf16.mxu0 0
        %1060 = vmatpush1.bf16.msra.mxu0 0
        %1061 = vmatprep.mubr.bf16.mxu0 0
        %1062 = vmatmul.mubr.bf16.gmra.mrb[0].mxu0 %v1024
        %v1063 = vpop.f32.mrb[0].mxu0
        %v1064 = vadd.f32 0.0, %v1063
        %v1065 = vpop.f32.mrb[0].mxu0
        %v1066 = vpop.f32.mrb[0].mxu0
        %v1067 = vpop.f32.mrb[0].mxu0
        %1068 = vdwg.mxu0
        %1070 = vrot.lane.b32.xlu0 %v968, 8
        %v1071 = vpop.permute.xlu0 %1070
        %1074 = vrot.lane.b32.xlu0 %v1016, 16
        %v1075 = vpop.permute.xlu0 %1074
        %1078 = vrot.lane.b32.xlu0 %v1064, 24
        %v1079 = vpop.permute.xlu0 %1078
        %v1081 = vsel %vm628, %v920, %v1071
        %vm1082 = vcmask 130048
        %v1083 = vsel %vm1082, %v1081, %v1075
        %vm1084 = vcmask 195584
        %v1085 = vsel %vm1084, %v1083, %v1079
        %v1086 = vpack.c.bf16 %v1085, %v1085
        %v1087 = vld [vmem:[#allocation2] sm:$0xf]
        %v1088 = vld [vmem:[#allocation2 + $0x4] sm:$0xf]
        %v1089 = vld [vmem:[#allocation2 + $0x8] sm:$0xf]
        %v1090 = vld [vmem:[#allocation2 + $0xc] sm:$0xf]
        %v1091 = vld [vmem:[%s5] sm:$0x1]
        %v1093 = vlaneseq
        %v1094 = vshrl.u32 %v1093, 7
        %v1095 = vsub.s32 0, %v1094
        %v1096 = vrot.slane %v1091, %v1095
        %v1102 = vunpack.c.l.b16 %v1087
        %v1103 = vunpack.c.l.b16 %v1088
        %v1104 = vunpack.c.l.b16 %v1089
        %v1105 = vunpack.c.l.b16 %v1090
        %v1106 = vpack.c.b16 %v1103, %v1102
        %v1107 = vpack.c.b16 %v1105, %v1104
        %v1111 = vsel %vm574, %v1086, 0
        %1113 = vmatprep.subr.bf16.mxu0 0
        %1114 = vmatpush1.bf16.msra.mxu0 %v1106
        %1115 = vmatprep.subr.bf16.mxu0 0
        %1116 = vmatpush1.bf16.msra.mxu0 %v1107
        %1117 = vmatprep.subr.bf16.mxu0 0
        %1118 = vmatpush1.bf16.msra.mxu0 0
        %1119 = vmatprep.subr.bf16.mxu0 0
        %1120 = vmatpush1.bf16.msra.mxu0 0
        %1121 = vmatprep.subr.bf16.mxu0 0
        %1122 = vmatpush1.bf16.msra.mxu0 0
        %1123 = vmatprep.subr.bf16.mxu0 0
        %1124 = vmatpush1.bf16.msra.mxu0 0
        %1125 = vmatprep.subr.bf16.mxu0 0
        %1126 = vmatpush1.bf16.msra.mxu0 0
        %1127 = vmatprep.subr.bf16.mxu0 0
        %1128 = vmatpush1.bf16.msra.mxu0 0
        %1129 = vmatprep.subr.bf16.mxu0 0
        %1130 = vmatpush1.bf16.msra.mxu0 0
        %1131 = vmatprep.subr.bf16.mxu0 0
        %1132 = vmatpush1.bf16.msra.mxu0 0
        %1133 = vmatprep.subr.bf16.mxu0 0
        %1134 = vmatpush1.bf16.msra.mxu0 0
        %1135 = vmatprep.subr.bf16.mxu0 0
        %1136 = vmatpush1.bf16.msra.mxu0 0
        %1137 = vmatprep.subr.bf16.mxu0 0
        %1138 = vmatpush1.bf16.msra.mxu0 0
        %1139 = vmatprep.subr.bf16.mxu0 0
        %1140 = vmatpush1.bf16.msra.mxu0 0
        %1141 = vmatprep.subr.bf16.mxu0 0
        %1142 = vmatpush1.bf16.msra.mxu0 0
        %1143 = vmatprep.subr.bf16.mxu0 0
        %1144 = vmatpush1.bf16.msra.mxu0 0
        %1145 = vmatprep.mubr.bf16.mxu0 0
        %1146 = vmatmul.mubr.bf16.gmra.mrb[0].mxu0 %v1111
        %v1147 = vpop.f32.mrb[0].mxu0
        %v1148 = vadd.f32 %v1096, %v1147
        %v1149 = vpop.f32.mrb[0].mxu0
        %v1150 = vpop.f32.mrb[0].mxu0
        %v1151 = vpop.f32.mrb[0].mxu0
        %1152 = vdwg.mxu0
        %v1153 = vadd.f32 %v1148, %v549
        %v1154 = vld [vmem:[%s6] sm:$0x1]
        %v1155 = vld [vmem:[%s7] sm:$0x1]
        %v1156 = vsel %vm574, %v1153, 0.0
        %1157 = vadd.xlane.f32.xlu0 %v1156
        %v1158 = vpop.xlane.xlu0 %1157
        %v1159 = vrcp.pop 32.0
        %v1160 = vmul.f32 %v1158, %v1159
        %v1161 = vsub.f32 %v1153, %v1160
        %v1162 = vmul.f32 %v1161, %v1161
        %v1163 = vsel %vm574, %v1162, 0.0
        %1164 = vadd.xlane.f32.xlu0 %v1163
        %v1165 = vpop.xlane.xlu0 %1164
        %v1166 = vmul.f32 %v1165, %v1159
        %v1167 = vadd.f32 %v1166, 1e-05
        %v1168 = vrsqrt.pop %v1167
        %v1169 = vmul.f32 %v1161, %v1168
        %v1171 = vlaneseq
        %v1172 = vshrl.u32 %v1171, 7
        %v1173 = vsub.s32 0, %v1172
        %v1174 = vrot.slane %v1154, %v1173
        %v1176 = vmul.f32 %v1169, %v1174
        %v1178 = vlaneseq
        %v1179 = vshrl.u32 %v1178, 7
        %v1180 = vsub.s32 0, %v1179
        %v1181 = vrot.slane %v1155, %v1180
        %v1183 = vadd.f32 %v1176, %v1181
        %v1184 = vpack.c.bf16 %v1183, %v1183
        %v1185 = vld [vmem:[#allocation5] sm:$0xf]
        %v1186 = vld [vmem:[#allocation5 + $0x4] sm:$0xf]
        %v1187 = vld [vmem:[#allocation5 + $0x8] sm:$0xf]
        %v1188 = vld [vmem:[#allocation5 + $0xc] sm:$0xf]
        %v1189 = vld [vmem:[%s9] sm:$0x1]
        %v1191 = vlaneseq
        %v1192 = vshrl.u32 %v1191, 7
        %v1193 = vsub.s32 0, %v1192
        %v1194 = vrot.slane %v1189, %v1193
        %v1200 = vunpack.c.l.b16 %v1185
        %v1201 = vunpack.c.l.b16 %v1186
        %v1202 = vunpack.c.l.b16 %v1187
        %v1203 = vunpack.c.l.b16 %v1188
        %v1204 = vpack.c.b16 %v1201, %v1200
        %v1205 = vpack.c.b16 %v1203, %v1202
        %v1209 = vsel %vm574, %v1184, 0
        %1211 = vmatprep.subr.bf16.mxu0 0
        %1212 = vmatpush1.bf16.msra.mxu0 %v1204
        %1213 = vmatprep.subr.bf16.mxu0 0
        %1214 = vmatpush1.bf16.msra.mxu0 %v1205
        %1215 = vmatprep.subr.bf16.mxu0 0
        %1216 = vmatpush1.bf16.msra.mxu0 0
        %1217 = vmatprep.subr.bf16.mxu0 0
        %1218 = vmatpush1.bf16.msra.mxu0 0
        %1219 = vmatprep.subr.bf16.mxu0 0
        %1220 = vmatpush1.bf16.msra.mxu0 0
        %1221 = vmatprep.subr.bf16.mxu0 0
        %1222 = vmatpush1.bf16.msra.mxu0 0
        %1223 = vmatprep.subr.bf16.mxu0 0
        %1224 = vmatpush1.bf16.msra.mxu0 0
        %1225 = vmatprep.subr.bf16.mxu0 0
        %1226 = vmatpush1.bf16.msra.mxu0 0
        %1227 = vmatprep.subr.bf16.mxu0 0
        %1228 = vmatpush1.bf16.msra.mxu0 0
        %1229 = vmatprep.subr.bf16.mxu0 0
        %1230 = vmatpush1.bf16.msra.mxu0 0
        %1231 = vmatprep.subr.bf16.mxu0 0
        %1232 = vmatpush1.bf16.msra.mxu0 0
        %1233 = vmatprep.subr.bf16.mxu0 0
        %1234 = vmatpush1.bf16.msra.mxu0 0
        %1235 = vmatprep.subr.bf16.mxu0 0
        %1236 = vmatpush1.bf16.msra.mxu0 0
        %1237 = vmatprep.subr.bf16.mxu0 0
        %1238 = vmatpush1.bf16.msra.mxu0 0
        %1239 = vmatprep.subr.bf16.mxu0 0
        %1240 = vmatpush1.bf16.msra.mxu0 0
        %1241 = vmatprep.subr.bf16.mxu0 0
        %1242 = vmatpush1.bf16.msra.mxu0 0
        %1243 = vmatprep.mubr.bf16.mxu0 0
        %1244 = vmatmul.mubr.bf16.gmra.mrb[0].mxu0 %v1209
        %v1245 = vpop.f32.mrb[0].mxu0
        %v1246 = vadd.f32 %v1194, %v1245
        %v1247 = vpop.f32.mrb[0].mxu0
        %v1248 = vpop.f32.mrb[0].mxu0
        %v1249 = vpop.f32.mrb[0].mxu0
        %1250 = vdwg.mxu0
        %v1251 = vmax.f32 %v1246, 0.0
        %v1252 = vpack.c.bf16 %v1251, %v1251
        %v1253 = vld [vmem:[%s10] sm:$0xf]
        %v1254 = vld [vmem:[%s10 + $0x4] sm:$0xf]
        %v1255 = vld [vmem:[%s10 + $0x8] sm:$0xf]
        %v1256 = vld [vmem:[%s10 + $0xc] sm:$0xf]
        %v1257 = vld [vmem:[%s10 + $0x10] sm:$0xf]
        %v1258 = vld [vmem:[%s10 + $0x14] sm:$0xf]
        %v1259 = vld [vmem:[%s10 + $0x18] sm:$0xf]
        %v1260 = vld [vmem:[%s10 + $0x1c] sm:$0xf]
        %v1261 = vld [vmem:[%s11] sm:$0x1]
        %v1263 = vlaneseq
        %v1264 = vshrl.u32 %v1263, 7
        %v1265 = vsub.s32 0, %v1264
        %v1266 = vrot.slane %v1261, %v1265
        %v1276 = vunpack.c.l.b16 %v1253
        %v1277 = vunpack.c.l.b16 %v1254
        %v1278 = vunpack.c.l.b16 %v1255
        %v1279 = vunpack.c.l.b16 %v1256
        %v1280 = vunpack.c.l.b16 %v1257
        %v1281 = vunpack.c.l.b16 %v1258
        %v1282 = vunpack.c.l.b16 %v1259
        %v1283 = vunpack.c.l.b16 %v1260
        %v1284 = vpack.c.b16 %v1277, %v1276
        %v1285 = vpack.c.b16 %v1279, %v1278
        %v1286 = vpack.c.b16 %v1281, %v1280
        %v1287 = vpack.c.b16 %v1283, %v1282
        %vm1292 = vcmask 523264
        %v1294 = vsel %vm1292, %v1252, 0
        %1296 = vmatprep.subr.bf16.mxu0 0
        %1297 = vmatpush1.bf16.msra.mxu0 %v1284
        %1298 = vmatprep.subr.bf16.mxu0 0
        %1299 = vmatpush1.bf16.msra.mxu0 %v1285
        %1300 = vmatprep.subr.bf16.mxu0 0
        %1301 = vmatpush1.bf16.msra.mxu0 %v1286
        %1302 = vmatprep.subr.bf16.mxu0 0
        %1303 = vmatpush1.bf16.msra.mxu0 %v1287
        %1304 = vmatprep.subr.bf16.mxu0 0
        %1305 = vmatpush1.bf16.msra.mxu0 0
        %1306 = vmatprep.subr.bf16.mxu0 0
        %1307 = vmatpush1.bf16.msra.mxu0 0
        %1308 = vmatprep.subr.bf16.mxu0 0
        %1309 = vmatpush1.bf16.msra.mxu0 0
        %1310 = vmatprep.subr.bf16.mxu0 0
        %1311 = vmatpush1.bf16.msra.mxu0 0
        %1312 = vmatprep.subr.bf16.mxu0 0
        %1313 = vmatpush1.bf16.msra.mxu0 0
        %1314 = vmatprep.subr.bf16.mxu0 0
        %1315 = vmatpush1.bf16.msra.mxu0 0
        %1316 = vmatprep.subr.bf16.mxu0 0
        %1317 = vmatpush1.bf16.msra.mxu0 0
        %1318 = vmatprep.subr.bf16.mxu0 0
        %1319 = vmatpush1.bf16.msra.mxu0 0
        %1320 = vmatprep.subr.bf16.mxu0 0
        %1321 = vmatpush1.bf16.msra.mxu0 0
        %1322 = vmatprep.subr.bf16.mxu0 0
        %1323 = vmatpush1.bf16.msra.mxu0 0
        %1324 = vmatprep.subr.bf16.mxu0 0
        %1325 = vmatpush1.bf16.msra.mxu0 0
        %1326 = vmatprep.subr.bf16.mxu0 0
        %1327 = vmatpush1.bf16.msra.mxu0 0
        %1328 = vmatprep.mubr.bf16.mxu0 0
        %1329 = vmatmul.mubr.bf16.gmra.mrb[0].mxu0 %v1294
        %v1330 = vpop.f32.mrb[0].mxu0
        %v1331 = vadd.f32 %v1266, %v1330
        %v1332 = vpop.f32.mrb[0].mxu0
        %v1333 = vpop.f32.mrb[0].mxu0
        %v1334 = vpop.f32.mrb[0].mxu0
        %1335 = vdwg.mxu0
        %v1336 = vadd.f32 %v1331, %v1183
        %v1337 = vld [vmem:[%s12] sm:$0x1]
        %v1338 = vld [vmem:[%s13] sm:$0x1]
        %v1339 = vsel %vm574, %v1336, 0.0
        %1340 = vadd.xlane.f32.xlu0 %v1339
        %v1341 = vpop.xlane.xlu0 %1340
        %v1342 = vmul.f32 %v1341, %v1159
        %v1343 = vsub.f32 %v1336, %v1342
        %v1344 = vmul.f32 %v1343, %v1343
        %v1345 = vsel %vm574, %v1344, 0.0
        %1346 = vadd.xlane.f32.xlu0 %v1345
        %v1347 = vpop.xlane.xlu0 %1346
        %v1348 = vmul.f32 %v1347, %v1159
        %v1349 = vadd.f32 %v1348, 1e-05
        %v1350 = vrsqrt.pop %v1349
        %v1351 = vmul.f32 %v1343, %v1350
        %v1353 = vlaneseq
        %v1354 = vshrl.u32 %v1353, 7
        %v1355 = vsub.s32 0, %v1354
        %v1356 = vrot.slane %v1337, %v1355
        %v1358 = vmul.f32 %v1351, %v1356
        %v1360 = vlaneseq
        %v1361 = vshrl.u32 %v1360, 7
        %v1362 = vsub.s32 0, %v1361
        %v1363 = vrot.slane %v1338, %v1362
        %v1365 = vadd.f32 %v1358, %v1363
        %1366 = vst.msk [vmem:[%s532] sm:$0xff] %vm574, %v1365
        %s1367 = sand.u32 %s347, 1
        %s1368 = scalar_lea.sflag [#allocation4], %s1367
        %s1369 = sand.u32 %s347, 1
        %s1370 = smul.addr %s1369, 8
        %s1371 = scalar_lea.vmem [#allocation7], %s1370
        %s1372 = sand.u32 %s373, 1
        %s1373 = scalar_lea.sflag [#allocation9], %s1372
        %s1374 = sand.u32 %s373, 1
        %s1375 = smul.addr %s1374, 32
        %s1376 = scalar_lea.vmem [#allocation8], %s1375
        // Predicated region
        $region85: #{tpu_custom_call.1} parent=75 // pred_check
          %p1377 = pneg %p357
        $region86: #{tpu_custom_call.1} parent=75 // pred_check_branch
          %1379 = sbr.rel (%p1377) target = $region88
        $region87: #{tpu_custom_call.1} parent=75 // pred_region
          %s1381 = ssub.s32 128, 128
          %1382 = vsyncadd %s1368, %s1381
          %s1383 = smul.addr %s35, 128
          %s1384 = scalar_lea.hbm %s14, %s1383
          %s1386 = sshll.u32 %s1371, 4
          %s1387 = int_to_ptr.vmem [resolvable:$true] %s1386
          %1389 = dma.vmem_to_hbm [thread:$0]  %s1387, 128, %s1384, %s1368
        $region88: #{tpu_custom_call.1} parent=75 // pred_fallthru
          _
        // Predicated region
        $region89: #{tpu_custom_call.1} parent=75 // pred_check
          %p1390 = pneg %p383
        $region90: #{tpu_custom_call.1} parent=75 // pred_check_branch
          %1392 = sbr.rel (%p1390) target = $region92
        $region91: #{tpu_custom_call.1} parent=75 // pred_region
          %s1394 = ssub.s32 512, 512
          %1395 = vsyncadd %s1373, %s1394
          %s1396 = smul.addr %s35, 4
          %s1397 = smul.addr %s1396, 128
          %s1398 = scalar_lea.hbm %s15, %s1397
          %s1399 = sshll.u32 %s1376, 4
          %s1400 = int_to_ptr.vmem [resolvable:$true] %s1399
          %1405 = dma.vmem_to_hbm [thread:$0]  %s1400, 512, %s1398, %s1373, 128, 128, 8
        $region92: #{tpu_custom_call.1} parent=75 // pred_fallthru
          _
      $region76: #{tpu_custom_call.1} parent=5 // pred_fallthru
        _
      %p1406 = scmp.le.s32.totalorder 2, %s30
      // Predicated region
      $region93: #{tpu_custom_call.1} parent=5 // pred_check
        %p1407 = pneg %p1406
      $region94: #{tpu_custom_call.1} parent=5 // pred_check_branch
        %1409 = sbr.rel (%p1407) target = $region96
      $region95: #{tpu_custom_call.1} parent=5 // pred_region
        %s1410 = ssub.s32 %s30, 2
        // Predicated region
        $region97: #{tpu_custom_call.1} parent=95 // pred_check
          %p1411 = pneg %p363
        $region98: #{tpu_custom_call.1} parent=95 // pred_check_branch
          %1413 = sbr.rel (%p1411) target = $region100
        $region99: #{tpu_custom_call.1} parent=95 // pred_region
          %s1414 = sand.u32 %s348, 1
          %s1415 = scalar_lea.sflag [#allocation4], %s1414
          %s1416 = sand.u32 %s348, 1
          %s1417 = smul.addr %s1416, 8
          %s1418 = scalar_lea.vmem [#allocation7], %s1417
          %1419 = dma.done %s1415, 128
        $region100: #{tpu_custom_call.1} parent=95 // pred_fallthru
          _
        // Predicated region
        $region101: #{tpu_custom_call.1} parent=95 // pred_check
          %p1420 = pneg %p389
        $region102: #{tpu_custom_call.1} parent=95 // pred_check_branch
          %1422 = sbr.rel (%p1420) target = $region104
        $region103: #{tpu_custom_call.1} parent=95 // pred_region
          %s1423 = sand.u32 %s374, 1
          %s1424 = scalar_lea.sflag [#allocation9], %s1423
          %s1425 = sand.u32 %s374, 1
          %s1426 = smul.addr %s1425, 32
          %s1427 = scalar_lea.vmem [#allocation8], %s1426
          %1428 = dma.done %s1424, 512
        $region104: #{tpu_custom_call.1} parent=95 // pred_fallthru
          _
      $region96: #{tpu_custom_call.1} parent=5 // pred_fallthru
        _
    $region6: #{tpu_custom_call.1} parent=1 // loop_footer
      %s34 = sadd.s32 1, %s30
    $region7: #{tpu_custom_call.1} parent=1 // loop_footer_branch
      %29 = sbr.rel target = $region3
    $region8: #{tpu_custom_call.1} parent=1 // loop_exit
      _
    %1429 = vsyncpa [#allocation3], 1
    %s1430 = scalar_lea.sflag [#allocation3], 1
    %1431 = vsyncpa %s1430, 1
    %1432 = vsyncpa [#allocation6], 1
    %1433 = vsyncpa [#allocation4], 1
    %s1434 = scalar_lea.sflag [#allocation4], 1
    %1435 = vsyncpa %s1434, 1
    %1436 = vsyncpa [#allocation9], 1
    %s1437 = scalar_lea.sflag [#allocation9], 1
    %1438 = vsyncpa %s1437, 1

</llo_original>
